<compile_context>
chip_gen: v5e
topology: v5e:2x2
jax: 0.10.0
libtpu: 0.0.40
codegen_flags: <defaults>
</compile_context>

<pallas_src>
import math

import jax
import jax.numpy as jnp
from jax.experimental import pallas as pl

# problem sizes consistent with the module (batch=2, max_length=8, hidden=32, heads=4)
N, L, H, HEADS = 2, 8, 32, 4
HEAD_SIZE = H // HEADS
NL = N * L                       # 16 rows of the (batch, position) slab
R = HEADS * NL                   # 64 rows of the lane-blocked attention problem
EPS = 1e-5                       # torch.nn.LayerNorm default
SCALE = 1.0 / math.sqrt(HEAD_SIZE)
NEG_INF = -1e30                  # padding / causal masked scores (finite: no NaNs)
NEG_CROSS = -1e32                # cross-batch scores: strictly dominated so even a
                                 # fully-padded row only mixes its own batch's keys
HI = jax.lax.Precision.HIGHEST

# mask-index construction uses shifts/ands (guaranteed cheap VALU lowering)
assert L & (L - 1) == 0 and N & (N - 1) == 0 and NL & (NL - 1) == 0
assert HEAD_SIZE & (HEAD_SIZE - 1) == 0


def _idx_div(x, d):   # x // d, d a compile-time power of two
    return jnp.right_shift(x, d.bit_length() - 1)


def _idx_mod(x, d):   # x % d, d a compile-time power of two
    return jnp.bitwise_and(x, d - 1)


# ----------------------------------------------------------------------------
# Pallas kernel (whole batch + all heads, one grid-less invocation)
# ----------------------------------------------------------------------------
def _make_kernel(masked: bool):
    """Ref shapes:
       kpm_ref   : (1, N*L)  int32 key padding mask, flattened (batch-major)
       q/k/v_ref : (N, L, H) float32
       w_ref     : (4H, H)   rows = [Wq; Wk; Wv; Wo]
       small_ref : (6, H)    rows = [bq; bk; bv; bo; ln_gamma; ln_beta]
       out_ref   : (N, L, H)
    """

    def kernel(kpm_ref, q_ref, k_ref, v_ref, w_ref, small_ref, out_ref):
        w = w_ref[...]                                  # (4H, H), resident in VMEM
        sm = small_ref[...]                             # (6, H)

        # leading-dim merges only: layout-preserving (sublane-major)
        q = q_ref[...].reshape(NL, H)
        k = k_ref[...].reshape(NL, H)
        v = v_ref[...].reshape(NL, H)

        # --- input projections: three small HIGHEST-precision MXU dots ---
        qp = jnp.dot(q, w[0 * H:1 * H], precision=HI,
                     preferred_element_type=jnp.float32) + sm[0:1]
        kp = jnp.dot(k, w[1 * H:2 * H], precision=HI,
                     preferred_element_type=jnp.float32) + sm[1:2]
        vp = jnp.dot(v, w[2 * H:3 * H], precision=HI,
                     preferred_element_type=jnp.float32) + sm[2:3]

        # --- masks, built once from iota (row order = (head, batch, query)) ---
        r_s = jax.lax.broadcasted_iota(jnp.int32, (R, NL), 0)
        c_s = jax.lax.broadcasted_iota(jnp.int32, (R, NL), 1)
        n_r = _idx_mod(_idx_div(r_s, L), N)             # row's batch
        q_r = _idx_mod(r_s, L)                          # row's query position
        n_c = _idx_div(c_s, L)                          # column's batch
        k_c = _idx_mod(c_s, L)                          # column's key position
        same_batch = n_r == n_c                         # (R, NL)
        key_ok = kpm_ref[...] != 0                      # (1, NL), broadcasts over rows
        if masked:
            key_ok = jnp.logical_and(key_ok, k_c <= q_r)   # subsequent mask

        rh = jax.lax.broadcasted_iota(jnp.int32, (R, H), 0)
        ch = jax.lax.broadcasted_iota(jnp.int32, (R, H), 1)
        own_head = _idx_div(rh, NL) == _idx_div(ch, HEAD_SIZE)   # (R, H) lane selector

        # --- lane-blocked multi-head attention: 2 matmuls for all batches & heads ---
        # replicate the query slab once per head (aligned sublane copies), keep only
        # each replica's own head lanes
        q_t = jnp.where(own_head, jnp.concatenate([qp] * HEADS, axis=0), 0.0)  # (R, H)

        # scores for every (head, batch, query) row against every (batch, key) column
        s = jnp.einsum('rd,cd->rc', q_t, kp, precision=HI,
                       preferred_element_type=jnp.float32) * SCALE             # (R, NL)
        s = jnp.where(key_ok, s, NEG_INF)
        s = jnp.where(same_batch, s, NEG_CROSS)
        s = s - jnp.max(s, axis=-1, keepdims=True)
        p = jnp.exp(s)
        p = p / jnp.sum(p, axis=-1, keepdims=True)      # exact softmax denominator

        ctx = jnp.dot(p, vp, precision=HI,
                      preferred_element_type=jnp.float32)                      # (R, H)
        ctx = jnp.where(own_head, ctx, 0.0)
        # reduce the head-replica axis: 3 aligned (NL, H) sublane adds; the result is
        # already in concatenated-head (N*L, H) layout — no lane shuffles.
        octx = ctx[0:NL]
        for h in range(1, HEADS):
            octx = octx + ctx[h * NL:(h + 1) * NL]

        # --- output projection + LayerNorm ---
        o = jnp.dot(octx, w[3 * H:4 * H], precision=HI,
                    preferred_element_type=jnp.float32) + sm[3:4]
        mu = jnp.mean(o, axis=-1, keepdims=True)
        var = jnp.mean((o - mu) * (o - mu), axis=-1, keepdims=True)
        y = (o - mu) * jax.lax.rsqrt(var + EPS) * sm[4:5] + sm[5:6]
        out_ref[...] = y.reshape(N, L, H)

    return kernel


# ----------------------------------------------------------------------------
# builder: packs constant params ONCE; per-call wrapper does no HLO packing
# ----------------------------------------------------------------------------
def make_mha(masked: bool, params):
    """Returns jitted forward(q, k, v, key_padding_mask) -> (N, L, H)."""
    # hoisted out of the per-call path (review item 1): computed once, closed over
    w_pack = jnp.concatenate(
        [params['wq'], params['wk'], params['wv'], params['wo']], axis=0)     # (4H, H)
    small = jnp.concatenate(
        [params['bq'], params['bk'], params['bv'],
         params['bo'], params['gamma'], params['beta']], axis=0)              # (6, H)

    call = pl.pallas_call(
        _make_kernel(masked),
        out_shape=jax.ShapeDtypeStruct((N, L, H), jnp.float32),
    )

    def fwd(q, k, v, key_padding_mask):
        kpm = key_padding_mask.astype(jnp.int32).reshape(1, NL)
        return call(kpm, q, k, v, w_pack, small)

    return jax.jit(fwd)


# ----------------------------------------------------------------------------
# pure-JAX reference (mirrors the PyTorch forward) for self-validation
# ----------------------------------------------------------------------------
def mha_ref(q, k, v, key_padding_mask, p, masked):
    qp = jnp.dot(q, p['wq'], precision=HI) + p['bq']
    kp = jnp.dot(k, p['wk'], precision=HI) + p['bk']
    vp = jnp.dot(v, p['wv'], precision=HI) + p['bv']

    def split(x):
        return x.reshape(N, L, HEADS, HEAD_SIZE).transpose(0, 2, 1, 3)  # (N,h,L,D)

    qh, kh, vh = split(qp), split(kp), split(vp)
    s = jnp.einsum('nhqd,nhkd->nhqk', qh, kh, precision=HI) * SCALE
    allow = (key_padding_mask != 0)[:, None, None, :]        # (N, 1, 1, L)
    if masked:
        causal = jnp.tril(jnp.ones((L, L), dtype=bool))
        allow = jnp.logical_and(allow, causal[None, None])
    s = jnp.where(allow, s, NEG_INF)
    w = jax.nn.softmax(s, axis=-1)
    ctx = jnp.einsum('nhqk,nhkd->nhqd', w, vh, precision=HI)
    ctx = ctx.transpose(0, 2, 1, 3).reshape(N, L, H)
    o = jnp.dot(ctx, p['wo'], precision=HI) + p['bo']
    mu = o.mean(axis=-1, keepdims=True)
    var = ((o - mu) ** 2).mean(axis=-1, keepdims=True)
    return (o - mu) / jnp.sqrt(var + EPS) * p['gamma'] + p['beta']


# ----------------------------------------------------------------------------
# deterministic synthetic parameters (torch.nn.Linear-style init, (in,out) layout)
# ----------------------------------------------------------------------------
def _init_linear(key, din, dout):
    k1, k2 = jax.random.split(key)
    lim = 1.0 / math.sqrt(din)
    W = jax.random.uniform(k1, (din, dout), jnp.float32, -lim, lim)
    b = jax.random.uniform(k2, (1, dout), jnp.float32, -lim, lim)
    return W, b


def init_params(key):
    ks = jax.random.split(key, 6)
    wq, bq = _init_linear(ks[0], H, H)
    wk, bk = _init_linear(ks[1], H, H)
    wv, bv = _init_linear(ks[2], H, H)
    wo, bo = _init_linear(ks[3], H, H)
    gamma = 1.0 + 0.1 * jax.random.normal(ks[4], (1, H), jnp.float32)
    beta = 0.1 * jax.random.normal(ks[5], (1, H), jnp.float32)
    return dict(wq=wq, bq=bq, wk=wk, bk=bk, wv=wv, bv=bv,
                wo=wo, bo=bo, gamma=gamma, beta=beta)


if __name__ == "__main__":
    key = jax.random.PRNGKey(0)
    kq, kk, kv, kparam = jax.random.split(key, 4)
    q = jax.random.normal(kq, (N, L, H), jnp.float32)
    k = jax.random.normal(kk, (N, L, H), jnp.float32)
    v = jax.random.normal(kv, (N, L, H), jnp.float32)
    # key padding mask: 1 = real token, 0 = padding (pad the tail of batch row 1)
    key_padding_mask = jnp.ones((N, L), jnp.int32).at[1, -2:].set(0)
    params = init_params(kparam)

    for masked in (True, False):      # decoder-style (causal) and encoder-style
        fwd = make_mha(masked, params)
        out = jax.block_until_ready(fwd(q, k, v, key_padding_mask))
        ref = mha_ref(q, k, v, key_padding_mask, params, masked)
        assert out.shape == (N, L, H)
        err = float(jnp.max(jnp.abs(out - ref)))
        assert jnp.allclose(out, ref, atol=1e-4, rtol=1e-4), err

    print("KERNEL_OK")
</pallas_src>

<mosaic_0001>
module attributes {stable_mosaic.version = 11 : i64} {
  func.func @kernel(%arg0: memref<1x16xi32, #tpu.memory_space<vmem>>, %arg1: memref<2x8x32xf32, #tpu.memory_space<vmem>>, %arg2: memref<2x8x32xf32, #tpu.memory_space<vmem>>, %arg3: memref<2x8x32xf32, #tpu.memory_space<vmem>>, %arg4: memref<128x32xf32, #tpu.memory_space<vmem>>, %arg5: memref<6x32xf32, #tpu.memory_space<vmem>>, %arg6: memref<2x8x32xf32, #tpu.memory_space<vmem>>) attributes {dimension_semantics = [], scalar_prefetch = 0 : i64, scratch_operands = 0 : i64, tpu.core_type = #tpu.core_type<tc>} {
    %c0 = arith.constant 0 : index
    %c0_0 = arith.constant 0 : index
    %0 = vector.load %arg4[%c0, %c0_0] : memref<128x32xf32, #tpu.memory_space<vmem>>, vector<128x32xf32>
    %c0_1 = arith.constant 0 : index
    %c0_2 = arith.constant 0 : index
    %1 = vector.load %arg5[%c0_1, %c0_2] : memref<6x32xf32, #tpu.memory_space<vmem>>, vector<6x32xf32>
    %c0_3 = arith.constant 0 : index
    %c0_4 = arith.constant 0 : index
    %c0_5 = arith.constant 0 : index
    %2 = vector.load %arg1[%c0_3, %c0_4, %c0_5] : memref<2x8x32xf32, #tpu.memory_space<vmem>>, vector<2x8x32xf32>
    %3 = vector.shape_cast %2 : vector<2x8x32xf32> to vector<16x32xf32>
    %c0_6 = arith.constant 0 : index
    %c0_7 = arith.constant 0 : index
    %c0_8 = arith.constant 0 : index
    %4 = vector.load %arg2[%c0_6, %c0_7, %c0_8] : memref<2x8x32xf32, #tpu.memory_space<vmem>>, vector<2x8x32xf32>
    %5 = vector.shape_cast %4 : vector<2x8x32xf32> to vector<16x32xf32>
    %c0_9 = arith.constant 0 : index
    %c0_10 = arith.constant 0 : index
    %c0_11 = arith.constant 0 : index
    %6 = vector.load %arg3[%c0_9, %c0_10, %c0_11] : memref<2x8x32xf32, #tpu.memory_space<vmem>>, vector<2x8x32xf32>
    %7 = vector.shape_cast %6 : vector<2x8x32xf32> to vector<16x32xf32>
    %8 = vector.extract_strided_slice %0 {offsets = [0, 0], sizes = [32, 32], strides = [1, 1]} : vector<128x32xf32> to vector<32x32xf32>
    %cst = arith.constant dense<0.000000e+00> : vector<16x32xf32>
    %9 = tpu.matmul %3, %8, %cst {dimension_numbers = #tpu.dot_dimension_numbers<[1], [0], [0], [1], [0, 0, 1, 1], [], []>, precision = #tpu.contract_precision<fp32>} : vector<16x32xf32>, vector<32x32xf32>, vector<16x32xf32> -> vector<16x32xf32>
    %10 = vector.extract_strided_slice %1 {offsets = [0, 0], sizes = [1, 32], strides = [1, 1]} : vector<6x32xf32> to vector<1x32xf32>
    %11 = vector.broadcast %10 : vector<1x32xf32> to vector<16x32xf32>
    %12 = arith.addf %9, %11 : vector<16x32xf32>
    %13 = vector.extract_strided_slice %0 {offsets = [32, 0], sizes = [32, 32], strides = [1, 1]} : vector<128x32xf32> to vector<32x32xf32>
    %cst_12 = arith.constant dense<0.000000e+00> : vector<16x32xf32>
    %14 = tpu.matmul %5, %13, %cst_12 {dimension_numbers = #tpu.dot_dimension_numbers<[1], [0], [0], [1], [0, 0, 1, 1], [], []>, precision = #tpu.contract_precision<fp32>} : vector<16x32xf32>, vector<32x32xf32>, vector<16x32xf32> -> vector<16x32xf32>
    %15 = vector.extract_strided_slice %1 {offsets = [1, 0], sizes = [1, 32], strides = [1, 1]} : vector<6x32xf32> to vector<1x32xf32>
    %16 = vector.broadcast %15 : vector<1x32xf32> to vector<16x32xf32>
    %17 = arith.addf %14, %16 : vector<16x32xf32>
    %18 = vector.extract_strided_slice %0 {offsets = [64, 0], sizes = [32, 32], strides = [1, 1]} : vector<128x32xf32> to vector<32x32xf32>
    %cst_13 = arith.constant dense<0.000000e+00> : vector<16x32xf32>
    %19 = tpu.matmul %7, %18, %cst_13 {dimension_numbers = #tpu.dot_dimension_numbers<[1], [0], [0], [1], [0, 0, 1, 1], [], []>, precision = #tpu.contract_precision<fp32>} : vector<16x32xf32>, vector<32x32xf32>, vector<16x32xf32> -> vector<16x32xf32>
    %20 = vector.extract_strided_slice %1 {offsets = [2, 0], sizes = [1, 32], strides = [1, 1]} : vector<6x32xf32> to vector<1x32xf32>
    %21 = vector.broadcast %20 : vector<1x32xf32> to vector<16x32xf32>
    %22 = arith.addf %19, %21 : vector<16x32xf32>
    %23 = tpu.iota {dimensions = array<i32: 0>} : vector<64x16xi32>
    %24 = tpu.iota {dimensions = array<i32: 1>} : vector<64x16xi32>
    %c3_i32 = arith.constant 3 : i32
    %25 = vector.broadcast %c3_i32 : i32 to vector<64x16xi32>
    %26 = arith.shrsi %23, %25 : vector<64x16xi32>
    %c1_i32 = arith.constant 1 : i32
    %27 = vector.broadcast %c1_i32 : i32 to vector<64x16xi32>
    %28 = arith.andi %26, %27 : vector<64x16xi32>
    %c7_i32 = arith.constant 7 : i32
    %29 = vector.broadcast %c7_i32 : i32 to vector<64x16xi32>
    %30 = arith.andi %23, %29 : vector<64x16xi32>
    %c3_i32_14 = arith.constant 3 : i32
    %31 = vector.broadcast %c3_i32_14 : i32 to vector<64x16xi32>
    %32 = arith.shrsi %24, %31 : vector<64x16xi32>
    %c7_i32_15 = arith.constant 7 : i32
    %33 = vector.broadcast %c7_i32_15 : i32 to vector<64x16xi32>
    %34 = arith.andi %24, %33 : vector<64x16xi32>
    %35 = arith.cmpi eq, %28, %32 : vector<64x16xi32>
    %c0_16 = arith.constant 0 : index
    %c0_17 = arith.constant 0 : index
    %36 = vector.load %arg0[%c0_16, %c0_17] : memref<1x16xi32, #tpu.memory_space<vmem>>, vector<1x16xi32>
    %c0_i32 = arith.constant 0 : i32
    %37 = vector.broadcast %c0_i32 : i32 to vector<1x16xi32>
    %38 = arith.cmpi ne, %36, %37 : vector<1x16xi32>
    %39 = arith.cmpi sle, %34, %30 : vector<64x16xi32>
    %40 = vector.broadcast %38 : vector<1x16xi1> to vector<64x16xi1>
    %41 = arith.andi %40, %39 : vector<64x16xi1>
    %42 = tpu.iota {dimensions = array<i32: 0>} : vector<64x32xi32>
    %43 = tpu.iota {dimensions = array<i32: 1>} : vector<64x32xi32>
    %c4_i32 = arith.constant 4 : i32
    %44 = vector.broadcast %c4_i32 : i32 to vector<64x32xi32>
    %45 = arith.shrsi %42, %44 : vector<64x32xi32>
    %c3_i32_18 = arith.constant 3 : i32
    %46 = vector.broadcast %c3_i32_18 : i32 to vector<64x32xi32>
    %47 = arith.shrsi %43, %46 : vector<64x32xi32>
    %48 = arith.cmpi eq, %45, %47 : vector<64x32xi32>
    %49 = tpu.concatenate %12, %12, %12, %12 in 0 : vector<16x32xf32>, vector<16x32xf32>, vector<16x32xf32>, vector<16x32xf32> -> vector<64x32xf32>
    %cst_19 = arith.constant 0.000000e+00 : f32
    %50 = vector.broadcast %cst_19 : f32 to vector<64x32xf32>
    %51 = arith.select %48, %49, %50 : vector<64x32xi1>, vector<64x32xf32>
    "tpu.trace_start"() <{level = 10 : i32, message = "rd,cd->rc"}> : () -> ()
    %cst_20 = arith.constant dense<0.000000e+00> : vector<64x16xf32>
    %52 = tpu.matmul %51, %17, %cst_20 {dimension_numbers = #tpu.dot_dimension_numbers<[1], [1], [0], [0], [0, 0, 1, 0], [], []>, precision = #tpu.contract_precision<fp32>} : vector<64x32xf32>, vector<16x32xf32>, vector<64x16xf32> -> vector<64x16xf32>
    "tpu.trace_stop"() : () -> ()
    %cst_21 = arith.constant 0.353553385 : f32
    %53 = vector.broadcast %cst_21 : f32 to vector<64x16xf32>
    %54 = arith.mulf %52, %53 : vector<64x16xf32>
    %cst_22 = arith.constant -1.000000e+30 : f32
    %55 = vector.broadcast %cst_22 : f32 to vector<64x16xf32>
    %56 = arith.select %41, %54, %55 : vector<64x16xi1>, vector<64x16xf32>
    %cst_23 = arith.constant -1.000000e+32 : f32
    %57 = vector.broadcast %cst_23 : f32 to vector<64x16xf32>
    %58 = arith.select %35, %56, %57 : vector<64x16xi1>, vector<64x16xf32>
    %cst_24 = arith.constant dense<0xFF800000> : vector<64xf32>
    %59 = vector.multi_reduction <maximumf>, %58, %cst_24 [1] : vector<64x16xf32> to vector<64xf32>
    %60 = vector.shape_cast %59 : vector<64xf32> to vector<64x1xf32>
    %61 = vector.broadcast %60 : vector<64x1xf32> to vector<64x16xf32>
    %62 = arith.subf %58, %61 : vector<64x16xf32>
    %63 = math.exp %62 : vector<64x16xf32>
    %cst_25 = arith.constant dense<0.000000e+00> : vector<64xf32>
    %64 = vector.multi_reduction <add>, %63, %cst_25 [1] : vector<64x16xf32> to vector<64xf32>
    %65 = vector.shape_cast %64 : vector<64xf32> to vector<64x1xf32>
    %66 = vector.broadcast %65 : vector<64x1xf32> to vector<64x16xf32>
    %67 = arith.divf %63, %66 : vector<64x16xf32>
    %cst_26 = arith.constant dense<0.000000e+00> : vector<64x32xf32>
    %68 = tpu.matmul %67, %22, %cst_26 {dimension_numbers = #tpu.dot_dimension_numbers<[1], [0], [0], [1], [0, 0, 1, 1], [], []>, precision = #tpu.contract_precision<fp32>} : vector<64x16xf32>, vector<16x32xf32>, vector<64x32xf32> -> vector<64x32xf32>
    %cst_27 = arith.constant 0.000000e+00 : f32
    %69 = vector.broadcast %cst_27 : f32 to vector<64x32xf32>
    %70 = arith.select %48, %68, %69 : vector<64x32xi1>, vector<64x32xf32>
    %71 = vector.extract_strided_slice %70 {offsets = [0, 0], sizes = [16, 32], strides = [1, 1]} : vector<64x32xf32> to vector<16x32xf32>
    %72 = vector.extract_strided_slice %70 {offsets = [16, 0], sizes = [16, 32], strides = [1, 1]} : vector<64x32xf32> to vector<16x32xf32>
    %73 = arith.addf %71, %72 : vector<16x32xf32>
    %74 = vector.extract_strided_slice %70 {offsets = [32, 0], sizes = [16, 32], strides = [1, 1]} : vector<64x32xf32> to vector<16x32xf32>
    %75 = arith.addf %73, %74 : vector<16x32xf32>
    %76 = vector.extract_strided_slice %70 {offsets = [48, 0], sizes = [16, 32], strides = [1, 1]} : vector<64x32xf32> to vector<16x32xf32>
    %77 = arith.addf %75, %76 : vector<16x32xf32>
    %78 = vector.extract_strided_slice %0 {offsets = [96, 0], sizes = [32, 32], strides = [1, 1]} : vector<128x32xf32> to vector<32x32xf32>
    %cst_28 = arith.constant dense<0.000000e+00> : vector<16x32xf32>
    %79 = tpu.matmul %77, %78, %cst_28 {dimension_numbers = #tpu.dot_dimension_numbers<[1], [0], [0], [1], [0, 0, 1, 1], [], []>, precision = #tpu.contract_precision<fp32>} : vector<16x32xf32>, vector<32x32xf32>, vector<16x32xf32> -> vector<16x32xf32>
    %80 = vector.extract_strided_slice %1 {offsets = [3, 0], sizes = [1, 32], strides = [1, 1]} : vector<6x32xf32> to vector<1x32xf32>
    %81 = vector.broadcast %80 : vector<1x32xf32> to vector<16x32xf32>
    %82 = arith.addf %79, %81 : vector<16x32xf32>
    %cst_29 = arith.constant dense<0.000000e+00> : vector<16xf32>
    %83 = vector.multi_reduction <add>, %82, %cst_29 [1] : vector<16x32xf32> to vector<16xf32>
    %84 = vector.shape_cast %83 : vector<16xf32> to vector<16x1xf32>
    %cst_30 = arith.constant 3.200000e+01 : f32
    %85 = vector.broadcast %cst_30 : f32 to vector<16x1xf32>
    %86 = arith.divf %84, %85 : vector<16x1xf32>
    %87 = vector.broadcast %86 : vector<16x1xf32> to vector<16x32xf32>
    %88 = arith.subf %82, %87 : vector<16x32xf32>
    %89 = vector.broadcast %86 : vector<16x1xf32> to vector<16x32xf32>
    %90 = arith.subf %82, %89 : vector<16x32xf32>
    %91 = arith.mulf %88, %90 : vector<16x32xf32>
    %cst_31 = arith.constant dense<0.000000e+00> : vector<16xf32>
    %92 = vector.multi_reduction <add>, %91, %cst_31 [1] : vector<16x32xf32> to vector<16xf32>
    %93 = vector.shape_cast %92 : vector<16xf32> to vector<16x1xf32>
    %cst_32 = arith.constant 3.200000e+01 : f32
    %94 = vector.broadcast %cst_32 : f32 to vector<16x1xf32>
    %95 = arith.divf %93, %94 : vector<16x1xf32>
    %96 = vector.broadcast %86 : vector<16x1xf32> to vector<16x32xf32>
    %97 = arith.subf %82, %96 : vector<16x32xf32>
    %cst_33 = arith.constant 9.99999974E-6 : f32
    %98 = vector.broadcast %cst_33 : f32 to vector<16x1xf32>
    %99 = arith.addf %95, %98 : vector<16x1xf32>
    %100 = math.rsqrt %99 : vector<16x1xf32>
    %101 = vector.broadcast %100 : vector<16x1xf32> to vector<16x32xf32>
    %102 = arith.mulf %97, %101 : vector<16x32xf32>
    %103 = vector.extract_strided_slice %1 {offsets = [4, 0], sizes = [1, 32], strides = [1, 1]} : vector<6x32xf32> to vector<1x32xf32>
    %104 = vector.broadcast %103 : vector<1x32xf32> to vector<16x32xf32>
    %105 = arith.mulf %102, %104 : vector<16x32xf32>
    %106 = vector.extract_strided_slice %1 {offsets = [5, 0], sizes = [1, 32], strides = [1, 1]} : vector<6x32xf32> to vector<1x32xf32>
    %107 = vector.broadcast %106 : vector<1x32xf32> to vector<16x32xf32>
    %108 = arith.addf %105, %107 : vector<16x32xf32>
    %109 = vector.shape_cast %108 : vector<16x32xf32> to vector<2x8x32xf32>
    %c0_34 = arith.constant 0 : index
    %c0_35 = arith.constant 0 : index
    %c0_36 = arith.constant 0 : index
    %110 = vector.load %arg6[%c0_34, %c0_35, %c0_36] : memref<2x8x32xf32, #tpu.memory_space<vmem>>, vector<2x8x32xf32>
    tpu.vector_store %arg6[%c0_34, %c0_35, %c0_36], %109 {strides = array<i32>} : memref<2x8x32xf32, #tpu.memory_space<vmem>>, vector<2x8x32xf32>,
    return
  }
}

</mosaic_0001>

<llo_original>
// kernel: fwd.1
$region0: #{fwd.1}
  #allocation0 [shape = 'u32[]', space=smem, size = 0x4, offset = 0x4, fixed_abs, tag = 'smem constant byte address 0x4 - core index']
  #allocation1 [shape = 'u32[72,128]{1,0:T(1,128)}', space=vmem, size = 0x9000, scoped, tag = 'internal scratch']
  %s0 = inlined_call_operand.vmem [shape: s32[1,16], index: 0, kind: input, shape index: {}]
  %s1 = inlined_call_operand.hbm [shape: f32[2,8,32], index: 1, kind: input, shape index: {}]
  %s2 = inlined_call_operand.hbm [shape: f32[2,8,32], index: 2, kind: input, shape index: {}]
  %s3 = inlined_call_operand.hbm [shape: f32[2,8,32], index: 3, kind: input, shape index: {}]
  %s4 = inlined_call_operand.hbm [shape: f32[128,32], index: 4, kind: input, shape index: {}]
  %s5 = inlined_call_operand.hbm [shape: f32[6,32], index: 5, kind: input, shape index: {}]
  %s6 = inlined_call_operand.hbm [shape: f32[2,8,32], index: 6, kind: output, shape index: {}]
  %s7 = sld [smem:[#allocation0]]
  $region54: #{fwd.1} parent=0
    _
  %s9 = ssub.s32 1, %s7
  %s10 = scalar_select 0, %s9, %s7
  $region1: #{fwd.1} parent=0
    #allocation2 [shape = 'u8[8192]{0}', space=vmem, size = 0x2000, scoped, tag = 'input window, operand 1, single buffered']
    #allocation3 [shape = 's32[1]{0}', space=sflag, size = 0x4, scoped, tag = 'scoped memory for fwd.1']
    #allocation4 [shape = 's32[1]{0}', space=sflag, size = 0x4, scoped, tag = 'scoped memory for fwd.1']
    #allocation5 [shape = 'u8[8192]{0}', space=vmem, size = 0x2000, scoped, tag = 'input window, operand 2, single buffered']
    #allocation6 [shape = 's32[1]{0}', space=sflag, size = 0x4, scoped, tag = 'scoped memory for fwd.1']
    #allocation7 [shape = 'u8[8192]{0}', space=vmem, size = 0x2000, scoped, tag = 'input window, operand 3, single buffered']
    #allocation8 [shape = 'u8[65536]{0}', space=vmem, size = 0x10000, scoped, tag = 'input window, operand 4, single buffered']
    #allocation9 [shape = 's32[1]{0}', space=sflag, size = 0x4, scoped, tag = 'scoped memory for fwd.1']
    #allocation10 [shape = 'u8[4096]{0}', space=vmem, size = 0x1000, scoped, tag = 'input window, operand 5, single buffered']
    #allocation11 [shape = 'u8[8192]{0}', space=vmem, size = 0x2000, scoped, tag = 'output window, operand 0, single buffered']
    %11 = vsyncpa [#allocation3], 0
    %12 = vsyncpa [#allocation6], 0
    %13 = vsyncpa [#allocation9], 0
    %14 = vsyncpa [#allocation4], 0
    // Predicated region
    $region2: #{fwd.1} parent=1 // pred_check
      _
    $region3: #{fwd.1} parent=1 // pred_check_branch
      %16 = sbr.rel (0) target = $region5
    $region4: #{fwd.1} parent=1 // pred_region
      _
    $region5: #{fwd.1} parent=1 // pred_fallthru
      _
    // Predicated region
    $region6: #{fwd.1} parent=1 // pred_check
      _
    $region7: #{fwd.1} parent=1 // pred_check_branch
      %18 = sbr.rel (0) target = $region9
    $region8: #{fwd.1} parent=1 // pred_region
      %20 = vsyncadd [#allocation3], 0
      %s21 = sshll.u32 %s1, 4
      %s22 = int_to_ptr.hbm [resolvable:$true] %s21
      %s23 = sshll.u32 [#allocation2], 4
      %s24 = int_to_ptr.vmem [resolvable:$true] %s23
      %29 = dma.hbm_to_vmem [thread:$0]  %s22, 256, %s24, [#allocation3], 128, 128, 8
    $region9: #{fwd.1} parent=1 // pred_fallthru
      _
    // Predicated region
    $region10: #{fwd.1} parent=1 // pred_check
      _
    $region11: #{fwd.1} parent=1 // pred_check_branch
      %31 = sbr.rel (0) target = $region13
    $region12: #{fwd.1} parent=1 // pred_region
      %33 = vsyncadd [#allocation6], 0
      %s34 = sshll.u32 %s2, 4
      %s35 = int_to_ptr.hbm [resolvable:$true] %s34
      %s36 = sshll.u32 [#allocation5], 4
      %s37 = int_to_ptr.vmem [resolvable:$true] %s36
      %42 = dma.hbm_to_vmem [thread:$0]  %s35, 256, %s37, [#allocation6], 128, 128, 8
    $region13: #{fwd.1} parent=1 // pred_fallthru
      _
    // Predicated region
    $region14: #{fwd.1} parent=1 // pred_check
      _
    $region15: #{fwd.1} parent=1 // pred_check_branch
      %44 = sbr.rel (0) target = $region17
    $region16: #{fwd.1} parent=1 // pred_region
      %46 = vsyncadd [#allocation6], 0
      %s47 = sshll.u32 %s3, 4
      %s48 = int_to_ptr.hbm [resolvable:$true] %s47
      %s49 = sshll.u32 [#allocation7], 4
      %s50 = int_to_ptr.vmem [resolvable:$true] %s49
      %55 = dma.hbm_to_vmem [thread:$0]  %s48, 256, %s50, [#allocation6], 128, 128, 8
    $region17: #{fwd.1} parent=1 // pred_fallthru
      _
    // Predicated region
    $region18: #{fwd.1} parent=1 // pred_check
      _
    $region19: #{fwd.1} parent=1 // pred_check_branch
      %57 = sbr.rel (0) target = $region21
    $region20: #{fwd.1} parent=1 // pred_region
      %59 = vsyncadd [#allocation9], 0
      %s60 = sshll.u32 %s4, 4
      %s61 = int_to_ptr.hbm [resolvable:$true] %s60
      %s62 = sshll.u32 [#allocation8], 4
      %s63 = int_to_ptr.vmem [resolvable:$true] %s62
      %68 = dma.hbm_to_vmem [thread:$0]  %s61, 2048, %s63, [#allocation9], 128, 128, 8
    $region21: #{fwd.1} parent=1 // pred_fallthru
      _
    // Predicated region
    $region22: #{fwd.1} parent=1 // pred_check
      _
    $region23: #{fwd.1} parent=1 // pred_check_branch
      %70 = sbr.rel (0) target = $region25
    $region24: #{fwd.1} parent=1 // pred_region
      %72 = vsyncadd [#allocation9], 0
      %s74 = sshll.u32 %s5, 4
      %s75 = int_to_ptr.hbm [resolvable:$true] %s74
      %s76 = sshll.u32 [#allocation10], 4
      %s77 = int_to_ptr.vmem [resolvable:$true] %s76
      %79 = dma.hbm_to_vmem [thread:$0]  %s75, 128, %s77, [#allocation9]
    $region25: #{fwd.1} parent=1 // pred_fallthru
      _
    // Predicated region
    $region26: #{fwd.1} parent=1 // pred_check
      _
    $region27: #{fwd.1} parent=1 // pred_check_branch
      %81 = sbr.rel (0) target = $region29
    $region28: #{fwd.1} parent=1 // pred_region
      %83 = dma.done [#allocation3], 256
    $region29: #{fwd.1} parent=1 // pred_fallthru
      _
    // Predicated region
    $region30: #{fwd.1} parent=1 // pred_check
      _
    $region31: #{fwd.1} parent=1 // pred_check_branch
      %85 = sbr.rel (0) target = $region33
    $region32: #{fwd.1} parent=1 // pred_region
      %87 = dma.done [#allocation6], 256
    $region33: #{fwd.1} parent=1 // pred_fallthru
      _
    // Predicated region
    $region34: #{fwd.1} parent=1 // pred_check
      _
    $region35: #{fwd.1} parent=1 // pred_check_branch
      %89 = sbr.rel (0) target = $region37
    $region36: #{fwd.1} parent=1 // pred_region
      %91 = dma.done [#allocation6], 256
    $region37: #{fwd.1} parent=1 // pred_fallthru
      _
    // Predicated region
    $region38: #{fwd.1} parent=1 // pred_check
      _
    $region39: #{fwd.1} parent=1 // pred_check_branch
      %93 = sbr.rel (0) target = $region41
    $region40: #{fwd.1} parent=1 // pred_region
      %95 = dma.done [#allocation9], 2048
    $region41: #{fwd.1} parent=1 // pred_fallthru
      _
    // Predicated region
    $region42: #{fwd.1} parent=1 // pred_check
      _
    $region43: #{fwd.1} parent=1 // pred_check_branch
      %97 = sbr.rel (0) target = $region45
    $region44: #{fwd.1} parent=1 // pred_region
      %99 = dma.done [#allocation9], 128
    $region45: #{fwd.1} parent=1 // pred_fallthru
      _
    %v100 = vld [vmem:[#allocation8] sm:$0xff]
    %v101 = vld [vmem:[#allocation8 + $0x8] sm:$0xff]
    %v102 = vld [vmem:[#allocation8 + $0x10] sm:$0xff]
    %v103 = vld [vmem:[#allocation8 + $0x18] sm:$0xff]
    %v104 = vld [vmem:[#allocation8 + $0x20] sm:$0xff]
    %v105 = vld [vmem:[#allocation8 + $0x28] sm:$0xff]
    %v106 = vld [vmem:[#allocation8 + $0x30] sm:$0xff]
    %v107 = vld [vmem:[#allocation8 + $0x38] sm:$0xff]
    %v108 = vld [vmem:[#allocation8 + $0x40] sm:$0xff]
    %v109 = vld [vmem:[#allocation8 + $0x48] sm:$0xff]
    %v110 = vld [vmem:[#allocation8 + $0x50] sm:$0xff]
    %v111 = vld [vmem:[#allocation8 + $0x58] sm:$0xff]
    %v112 = vld [vmem:[#allocation8 + $0x60] sm:$0xff]
    %v113 = vld [vmem:[#allocation8 + $0x68] sm:$0xff]
    %v114 = vld [vmem:[#allocation8 + $0x70] sm:$0xff]
    %v115 = vld [vmem:[#allocation8 + $0x78] sm:$0xff]
    %v116 = vld [vmem:[#allocation10] sm:$0x3f]
    %v117 = vld [vmem:[#allocation2] sm:$0xff]
    %v118 = vld [vmem:[#allocation2 + $0x8] sm:$0xff]
    %v119 = vld [vmem:[#allocation5] sm:$0xff]
    %v120 = vld [vmem:[#allocation5 + $0x8] sm:$0xff]
    %v121 = vld [vmem:[#allocation7] sm:$0xff]
    %v122 = vld [vmem:[#allocation7 + $0x8] sm:$0xff]
    %v123 = vperm.slane %v116, 0
    %vm124 = vcmask 261120
    %v126 = vsel %vm124, %v117, 0
    %v129 = vsel %vm124, %v118, 0
    %131 = vmatpush.msra.mxu0 0.0
    %132 = vmatpush.msra.mxu0 0.0
    %133 = vmatpush.msra.mxu0 0.0
    %134 = vmatpush.msra.mxu0 0.0
    %135 = vmatpush.msra.mxu0 0.0
    %136 = vmatpush.msra.mxu0 0.0
    %137 = vmatpush.msra.mxu0 0.0
    %138 = vmatpush.msra.mxu0 0.0
    %139 = vmatpush.msra.mxu0 0.0
    %140 = vmatpush.msra.mxu0 0.0
    %141 = vmatpush.msra.mxu0 0.0
    %142 = vmatpush.msra.mxu0 0.0
    %v143 = vand.u32 %v103, 4294901760
    %144 = vmatpush.msra.mxu0 %v143
    %v145 = vand.u32 %v102, 4294901760
    %146 = vmatpush.msra.mxu0 %v145
    %v147 = vand.u32 %v101, 4294901760
    %148 = vmatpush.msra.mxu0 %v147
    %v149 = vand.u32 %v100, 4294901760
    %150 = vmatpush.msra.mxu0 %v149
    %v151 = vand.u32 %v126, 4294901760
    %v152 = vsub.f32 %v126, %v151
    %v153 = vand.u32 %v152, 4294901760
    %v154 = vsub.f32 %v152, %v153
    %v155 = vand.u32 %v154, 4294901760
    %156 = vmatmul.f32.gmra.mxu0 %v155
    %v157 = vpop.f32.mrf.mxu0
    %v158 = vadd.f32 %v123, %v157
    %v159 = vand.u32 %v129, 4294901760
    %v160 = vsub.f32 %v129, %v159
    %v161 = vand.u32 %v160, 4294901760
    %v162 = vsub.f32 %v160, %v161
    %v163 = vand.u32 %v162, 4294901760
    %164 = vmatmul.f32.gmra.mxu0 %v163
    %v165 = vpop.f32.mrf.mxu0
    %v166 = vadd.f32 %v123, %v165
    %167 = vdwg.mxu0
    %168 = vmatpush.msra.mxu0 0.0
    %169 = vmatpush.msra.mxu0 0.0
    %170 = vmatpush.msra.mxu0 0.0
    %171 = vmatpush.msra.mxu0 0.0
    %172 = vmatpush.msra.mxu0 0.0
    %173 = vmatpush.msra.mxu0 0.0
    %174 = vmatpush.msra.mxu0 0.0
    %175 = vmatpush.msra.mxu0 0.0
    %176 = vmatpush.msra.mxu0 0.0
    %177 = vmatpush.msra.mxu0 0.0
    %178 = vmatpush.msra.mxu0 0.0
    %179 = vmatpush.msra.mxu0 0.0
    %v180 = vand.u32 %v103, 4294901760
    %v181 = vsub.f32 %v103, %v180
    %v182 = vand.u32 %v181, 4294901760
    %v183 = vsub.f32 %v181, %v182
    %v184 = vand.u32 %v183, 4294901760
    %185 = vmatpush.msra.mxu0 %v184
    %v186 = vand.u32 %v102, 4294901760
    %v187 = vsub.f32 %v102, %v186
    %v188 = vand.u32 %v187, 4294901760
    %v189 = vsub.f32 %v187, %v188
    %v190 = vand.u32 %v189, 4294901760
    %191 = vmatpush.msra.mxu0 %v190
    %v192 = vand.u32 %v101, 4294901760
    %v193 = vsub.f32 %v101, %v192
    %v194 = vand.u32 %v193, 4294901760
    %v195 = vsub.f32 %v193, %v194
    %v196 = vand.u32 %v195, 4294901760
    %197 = vmatpush.msra.mxu0 %v196
    %v198 = vand.u32 %v100, 4294901760
    %v199 = vsub.f32 %v100, %v198
    %v200 = vand.u32 %v199, 4294901760
    %v201 = vsub.f32 %v199, %v200
    %v202 = vand.u32 %v201, 4294901760
    %203 = vmatpush.msra.mxu0 %v202
    %v204 = vand.u32 %v126, 4294901760
    %205 = vmatmul.f32.gmra.mxu0 %v204
    %v206 = vpop.f32.mrf.mxu0
    %v207 = vadd.f32 %v158, %v206
    %v208 = vand.u32 %v129, 4294901760
    %209 = vmatmul.f32.gmra.mxu0 %v208
    %v210 = vpop.f32.mrf.mxu0
    %v211 = vadd.f32 %v166, %v210
    %212 = vdwg.mxu0
    %213 = vmatpush.msra.mxu0 0.0
    %214 = vmatpush.msra.mxu0 0.0
    %215 = vmatpush.msra.mxu0 0.0
    %216 = vmatpush.msra.mxu0 0.0
    %217 = vmatpush.msra.mxu0 0.0
    %218 = vmatpush.msra.mxu0 0.0
    %219 = vmatpush.msra.mxu0 0.0
    %220 = vmatpush.msra.mxu0 0.0
    %221 = vmatpush.msra.mxu0 0.0
    %222 = vmatpush.msra.mxu0 0.0
    %223 = vmatpush.msra.mxu0 0.0
    %224 = vmatpush.msra.mxu0 0.0
    %v225 = vand.u32 %v103, 4294901760
    %v226 = vsub.f32 %v103, %v225
    %227 = vmatpush.msra.mxu0 %v226
    %v228 = vand.u32 %v102, 4294901760
    %v229 = vsub.f32 %v102, %v228
    %230 = vmatpush.msra.mxu0 %v229
    %v231 = vand.u32 %v101, 4294901760
    %v232 = vsub.f32 %v101, %v231
    %233 = vmatpush.msra.mxu0 %v232
    %v234 = vand.u32 %v100, 4294901760
    %v235 = vsub.f32 %v100, %v234
    %236 = vmatpush.msra.mxu0 %v235
    %v237 = vand.u32 %v126, 4294901760
    %v238 = vsub.f32 %v126, %v237
    %239 = vmatmul.f32.gmra.mxu0 %v238
    %v240 = vpop.f32.mrf.mxu0
    %v241 = vadd.f32 %v207, %v240
    %v242 = vand.u32 %v129, 4294901760
    %v243 = vsub.f32 %v129, %v242
    %244 = vmatmul.f32.gmra.mxu0 %v243
    %v245 = vpop.f32.mrf.mxu0
    %v246 = vadd.f32 %v211, %v245
    %247 = vdwg.mxu0
    %248 = vmatpush.msra.mxu0 0.0
    %249 = vmatpush.msra.mxu0 0.0
    %250 = vmatpush.msra.mxu0 0.0
    %251 = vmatpush.msra.mxu0 0.0
    %252 = vmatpush.msra.mxu0 0.0
    %253 = vmatpush.msra.mxu0 0.0
    %254 = vmatpush.msra.mxu0 0.0
    %255 = vmatpush.msra.mxu0 0.0
    %256 = vmatpush.msra.mxu0 0.0
    %257 = vmatpush.msra.mxu0 0.0
    %258 = vmatpush.msra.mxu0 0.0
    %259 = vmatpush.msra.mxu0 0.0
    %v260 = vand.u32 %v103, 4294901760
    %261 = vmatpush.msra.mxu0 %v260
    %v262 = vand.u32 %v102, 4294901760
    %263 = vmatpush.msra.mxu0 %v262
    %v264 = vand.u32 %v101, 4294901760
    %265 = vmatpush.msra.mxu0 %v264
    %v266 = vand.u32 %v100, 4294901760
    %267 = vmatpush.msra.mxu0 %v266
    %v268 = vand.u32 %v126, 4294901760
    %v269 = vsub.f32 %v126, %v268
    %v270 = vand.u32 %v269, 4294901760
    %271 = vmatmul.f32.gmra.mxu0 %v270
    %v272 = vpop.f32.mrf.mxu0
    %v273 = vadd.f32 %v241, %v272
    %v274 = vand.u32 %v129, 4294901760
    %v275 = vsub.f32 %v129, %v274
    %v276 = vand.u32 %v275, 4294901760
    %277 = vmatmul.f32.gmra.mxu0 %v276
    %v278 = vpop.f32.mrf.mxu0
    %v279 = vadd.f32 %v246, %v278
    %280 = vdwg.mxu0
    %281 = vmatpush.msra.mxu0 0.0
    %282 = vmatpush.msra.mxu0 0.0
    %283 = vmatpush.msra.mxu0 0.0
    %284 = vmatpush.msra.mxu0 0.0
    %285 = vmatpush.msra.mxu0 0.0
    %286 = vmatpush.msra.mxu0 0.0
    %287 = vmatpush.msra.mxu0 0.0
    %288 = vmatpush.msra.mxu0 0.0
    %289 = vmatpush.msra.mxu0 0.0
    %290 = vmatpush.msra.mxu0 0.0
    %291 = vmatpush.msra.mxu0 0.0
    %292 = vmatpush.msra.mxu0 0.0
    %v293 = vand.u32 %v103, 4294901760
    %v294 = vsub.f32 %v103, %v293
    %v295 = vand.u32 %v294, 4294901760
    %296 = vmatpush.msra.mxu0 %v295
    %v297 = vand.u32 %v102, 4294901760
    %v298 = vsub.f32 %v102, %v297
    %v299 = vand.u32 %v298, 4294901760
    %300 = vmatpush.msra.mxu0 %v299
    %v301 = vand.u32 %v101, 4294901760
    %v302 = vsub.f32 %v101, %v301
    %v303 = vand.u32 %v302, 4294901760
    %304 = vmatpush.msra.mxu0 %v303
    %v305 = vand.u32 %v100, 4294901760
    %v306 = vsub.f32 %v100, %v305
    %v307 = vand.u32 %v306, 4294901760
    %308 = vmatpush.msra.mxu0 %v307
    %v309 = vand.u32 %v126, 4294901760
    %310 = vmatmul.f32.gmra.mxu0 %v309
    %v311 = vpop.f32.mrf.mxu0
    %v312 = vadd.f32 %v273, %v311
    %v313 = vand.u32 %v129, 4294901760
    %314 = vmatmul.f32.gmra.mxu0 %v313
    %v315 = vpop.f32.mrf.mxu0
    %v316 = vadd.f32 %v279, %v315
    %317 = vdwg.mxu0
    %318 = vmatpush.msra.mxu0 0.0
    %319 = vmatpush.msra.mxu0 0.0
    %320 = vmatpush.msra.mxu0 0.0
    %321 = vmatpush.msra.mxu0 0.0
    %322 = vmatpush.msra.mxu0 0.0
    %323 = vmatpush.msra.mxu0 0.0
    %324 = vmatpush.msra.mxu0 0.0
    %325 = vmatpush.msra.mxu0 0.0
    %326 = vmatpush.msra.mxu0 0.0
    %327 = vmatpush.msra.mxu0 0.0
    %328 = vmatpush.msra.mxu0 0.0
    %329 = vmatpush.msra.mxu0 0.0
    %v330 = vand.u32 %v103, 4294901760
    %331 = vmatpush.msra.mxu0 %v330
    %v332 = vand.u32 %v102, 4294901760
    %333 = vmatpush.msra.mxu0 %v332
    %v334 = vand.u32 %v101, 4294901760
    %335 = vmatpush.msra.mxu0 %v334
    %v336 = vand.u32 %v100, 4294901760
    %337 = vmatpush.msra.mxu0 %v336
    %v338 = vand.u32 %v126, 4294901760
    %339 = vmatmul.f32.gmra.mxu0 %v338
    %v340 = vpop.f32.mrf.mxu0
    %v341 = vadd.f32 %v312, %v340
    %v342 = vand.u32 %v129, 4294901760
    %343 = vmatmul.f32.gmra.mxu0 %v342
    %v344 = vpop.f32.mrf.mxu0
    %v345 = vadd.f32 %v316, %v344
    %346 = vdwg.mxu0
    %v347 = vperm.slane %v116, 1
    %v349 = vsel %vm124, %v119, 0
    %v352 = vsel %vm124, %v120, 0
    %354 = vmatpush.msra.mxu0 0.0
    %355 = vmatpush.msra.mxu0 0.0
    %356 = vmatpush.msra.mxu0 0.0
    %357 = vmatpush.msra.mxu0 0.0
    %358 = vmatpush.msra.mxu0 0.0
    %359 = vmatpush.msra.mxu0 0.0
    %360 = vmatpush.msra.mxu0 0.0
    %361 = vmatpush.msra.mxu0 0.0
    %362 = vmatpush.msra.mxu0 0.0
    %363 = vmatpush.msra.mxu0 0.0
    %364 = vmatpush.msra.mxu0 0.0
    %365 = vmatpush.msra.mxu0 0.0
    %v366 = vand.u32 %v107, 4294901760
    %367 = vmatpush.msra.mxu0 %v366
    %v368 = vand.u32 %v106, 4294901760
    %369 = vmatpush.msra.mxu0 %v368
    %v370 = vand.u32 %v105, 4294901760
    %371 = vmatpush.msra.mxu0 %v370
    %v372 = vand.u32 %v104, 4294901760
    %373 = vmatpush.msra.mxu0 %v372
    %v374 = vand.u32 %v349, 4294901760
    %v375 = vsub.f32 %v349, %v374
    %v376 = vand.u32 %v375, 4294901760
    %v377 = vsub.f32 %v375, %v376
    %v378 = vand.u32 %v377, 4294901760
    %379 = vmatmul.f32.gmra.mxu0 %v378
    %v380 = vpop.f32.mrf.mxu0
    %v381 = vadd.f32 %v347, %v380
    %v382 = vand.u32 %v352, 4294901760
    %v383 = vsub.f32 %v352, %v382
    %v384 = vand.u32 %v383, 4294901760
    %v385 = vsub.f32 %v383, %v384
    %v386 = vand.u32 %v385, 4294901760
    %387 = vmatmul.f32.gmra.mxu0 %v386
    %v388 = vpop.f32.mrf.mxu0
    %v389 = vadd.f32 %v347, %v388
    %390 = vdwg.mxu0
    %391 = vmatpush.msra.mxu0 0.0
    %392 = vmatpush.msra.mxu0 0.0
    %393 = vmatpush.msra.mxu0 0.0
    %394 = vmatpush.msra.mxu0 0.0
    %395 = vmatpush.msra.mxu0 0.0
    %396 = vmatpush.msra.mxu0 0.0
    %397 = vmatpush.msra.mxu0 0.0
    %398 = vmatpush.msra.mxu0 0.0
    %399 = vmatpush.msra.mxu0 0.0
    %400 = vmatpush.msra.mxu0 0.0
    %401 = vmatpush.msra.mxu0 0.0
    %402 = vmatpush.msra.mxu0 0.0
    %v403 = vand.u32 %v107, 4294901760
    %v404 = vsub.f32 %v107, %v403
    %v405 = vand.u32 %v404, 4294901760
    %v406 = vsub.f32 %v404, %v405
    %v407 = vand.u32 %v406, 4294901760
    %408 = vmatpush.msra.mxu0 %v407
    %v409 = vand.u32 %v106, 4294901760
    %v410 = vsub.f32 %v106, %v409
    %v411 = vand.u32 %v410, 4294901760
    %v412 = vsub.f32 %v410, %v411
    %v413 = vand.u32 %v412, 4294901760
    %414 = vmatpush.msra.mxu0 %v413
    %v415 = vand.u32 %v105, 4294901760
    %v416 = vsub.f32 %v105, %v415
    %v417 = vand.u32 %v416, 4294901760
    %v418 = vsub.f32 %v416, %v417
    %v419 = vand.u32 %v418, 4294901760
    %420 = vmatpush.msra.mxu0 %v419
    %v421 = vand.u32 %v104, 4294901760
    %v422 = vsub.f32 %v104, %v421
    %v423 = vand.u32 %v422, 4294901760
    %v424 = vsub.f32 %v422, %v423
    %v425 = vand.u32 %v424, 4294901760
    %426 = vmatpush.msra.mxu0 %v425
    %v427 = vand.u32 %v349, 4294901760
    %428 = vmatmul.f32.gmra.mxu0 %v427
    %v429 = vpop.f32.mrf.mxu0
    %v430 = vadd.f32 %v381, %v429
    %v431 = vand.u32 %v352, 4294901760
    %432 = vmatmul.f32.gmra.mxu0 %v431
    %v433 = vpop.f32.mrf.mxu0
    %v434 = vadd.f32 %v389, %v433
    %435 = vdwg.mxu0
    %436 = vmatpush.msra.mxu0 0.0
    %437 = vmatpush.msra.mxu0 0.0
    %438 = vmatpush.msra.mxu0 0.0
    %439 = vmatpush.msra.mxu0 0.0
    %440 = vmatpush.msra.mxu0 0.0
    %441 = vmatpush.msra.mxu0 0.0
    %442 = vmatpush.msra.mxu0 0.0
    %443 = vmatpush.msra.mxu0 0.0
    %444 = vmatpush.msra.mxu0 0.0
    %445 = vmatpush.msra.mxu0 0.0
    %446 = vmatpush.msra.mxu0 0.0
    %447 = vmatpush.msra.mxu0 0.0
    %v448 = vand.u32 %v107, 4294901760
    %v449 = vsub.f32 %v107, %v448
    %450 = vmatpush.msra.mxu0 %v449
    %v451 = vand.u32 %v106, 4294901760
    %v452 = vsub.f32 %v106, %v451
    %453 = vmatpush.msra.mxu0 %v452
    %v454 = vand.u32 %v105, 4294901760
    %v455 = vsub.f32 %v105, %v454
    %456 = vmatpush.msra.mxu0 %v455
    %v457 = vand.u32 %v104, 4294901760
    %v458 = vsub.f32 %v104, %v457
    %459 = vmatpush.msra.mxu0 %v458
    %v460 = vand.u32 %v349, 4294901760
    %v461 = vsub.f32 %v349, %v460
    %462 = vmatmul.f32.gmra.mxu0 %v461
    %v463 = vpop.f32.mrf.mxu0
    %v464 = vadd.f32 %v430, %v463
    %v465 = vand.u32 %v352, 4294901760
    %v466 = vsub.f32 %v352, %v465
    %467 = vmatmul.f32.gmra.mxu0 %v466
    %v468 = vpop.f32.mrf.mxu0
    %v469 = vadd.f32 %v434, %v468
    %470 = vdwg.mxu0
    %471 = vmatpush.msra.mxu0 0.0
    %472 = vmatpush.msra.mxu0 0.0
    %473 = vmatpush.msra.mxu0 0.0
    %474 = vmatpush.msra.mxu0 0.0
    %475 = vmatpush.msra.mxu0 0.0
    %476 = vmatpush.msra.mxu0 0.0
    %477 = vmatpush.msra.mxu0 0.0
    %478 = vmatpush.msra.mxu0 0.0
    %479 = vmatpush.msra.mxu0 0.0
    %480 = vmatpush.msra.mxu0 0.0
    %481 = vmatpush.msra.mxu0 0.0
    %482 = vmatpush.msra.mxu0 0.0
    %v483 = vand.u32 %v107, 4294901760
    %484 = vmatpush.msra.mxu0 %v483
    %v485 = vand.u32 %v106, 4294901760
    %486 = vmatpush.msra.mxu0 %v485
    %v487 = vand.u32 %v105, 4294901760
    %488 = vmatpush.msra.mxu0 %v487
    %v489 = vand.u32 %v104, 4294901760
    %490 = vmatpush.msra.mxu0 %v489
    %v491 = vand.u32 %v349, 4294901760
    %v492 = vsub.f32 %v349, %v491
    %v493 = vand.u32 %v492, 4294901760
    %494 = vmatmul.f32.gmra.mxu0 %v493
    %v495 = vpop.f32.mrf.mxu0
    %v496 = vadd.f32 %v464, %v495
    %v497 = vand.u32 %v352, 4294901760
    %v498 = vsub.f32 %v352, %v497
    %v499 = vand.u32 %v498, 4294901760
    %500 = vmatmul.f32.gmra.mxu0 %v499
    %v501 = vpop.f32.mrf.mxu0
    %v502 = vadd.f32 %v469, %v501
    %503 = vdwg.mxu0
    %504 = vmatpush.msra.mxu0 0.0
    %505 = vmatpush.msra.mxu0 0.0
    %506 = vmatpush.msra.mxu0 0.0
    %507 = vmatpush.msra.mxu0 0.0
    %508 = vmatpush.msra.mxu0 0.0
    %509 = vmatpush.msra.mxu0 0.0
    %510 = vmatpush.msra.mxu0 0.0
    %511 = vmatpush.msra.mxu0 0.0
    %512 = vmatpush.msra.mxu0 0.0
    %513 = vmatpush.msra.mxu0 0.0
    %514 = vmatpush.msra.mxu0 0.0
    %515 = vmatpush.msra.mxu0 0.0
    %v516 = vand.u32 %v107, 4294901760
    %v517 = vsub.f32 %v107, %v516
    %v518 = vand.u32 %v517, 4294901760
    %519 = vmatpush.msra.mxu0 %v518
    %v520 = vand.u32 %v106, 4294901760
    %v521 = vsub.f32 %v106, %v520
    %v522 = vand.u32 %v521, 4294901760
    %523 = vmatpush.msra.mxu0 %v522
    %v524 = vand.u32 %v105, 4294901760
    %v525 = vsub.f32 %v105, %v524
    %v526 = vand.u32 %v525, 4294901760
    %527 = vmatpush.msra.mxu0 %v526
    %v528 = vand.u32 %v104, 4294901760
    %v529 = vsub.f32 %v104, %v528
    %v530 = vand.u32 %v529, 4294901760
    %531 = vmatpush.msra.mxu0 %v530
    %v532 = vand.u32 %v349, 4294901760
    %533 = vmatmul.f32.gmra.mxu0 %v532
    %v534 = vpop.f32.mrf.mxu0
    %v535 = vadd.f32 %v496, %v534
    %v536 = vand.u32 %v352, 4294901760
    %537 = vmatmul.f32.gmra.mxu0 %v536
    %v538 = vpop.f32.mrf.mxu0
    %v539 = vadd.f32 %v502, %v538
    %540 = vdwg.mxu0
    %541 = vmatpush.msra.mxu0 0.0
    %542 = vmatpush.msra.mxu0 0.0
    %543 = vmatpush.msra.mxu0 0.0
    %544 = vmatpush.msra.mxu0 0.0
    %545 = vmatpush.msra.mxu0 0.0
    %546 = vmatpush.msra.mxu0 0.0
    %547 = vmatpush.msra.mxu0 0.0
    %548 = vmatpush.msra.mxu0 0.0
    %549 = vmatpush.msra.mxu0 0.0
    %550 = vmatpush.msra.mxu0 0.0
    %551 = vmatpush.msra.mxu0 0.0
    %552 = vmatpush.msra.mxu0 0.0
    %v553 = vand.u32 %v107, 4294901760
    %554 = vmatpush.msra.mxu0 %v553
    %v555 = vand.u32 %v106, 4294901760
    %556 = vmatpush.msra.mxu0 %v555
    %v557 = vand.u32 %v105, 4294901760
    %558 = vmatpush.msra.mxu0 %v557
    %v559 = vand.u32 %v104, 4294901760
    %560 = vmatpush.msra.mxu0 %v559
    %v561 = vand.u32 %v349, 4294901760
    %562 = vmatmul.f32.gmra.mxu0 %v561
    %v563 = vpop.f32.mrf.mxu0
    %v564 = vadd.f32 %v535, %v563
    %v565 = vand.u32 %v352, 4294901760
    %566 = vmatmul.f32.gmra.mxu0 %v565
    %v567 = vpop.f32.mrf.mxu0
    %v568 = vadd.f32 %v539, %v567
    %569 = vdwg.mxu0
    %v570 = vperm.slane %v116, 2
    %v572 = vsel %vm124, %v121, 0
    %v575 = vsel %vm124, %v122, 0
    %577 = vmatpush.msra.mxu0 0.0
    %578 = vmatpush.msra.mxu0 0.0
    %579 = vmatpush.msra.mxu0 0.0
    %580 = vmatpush.msra.mxu0 0.0
    %581 = vmatpush.msra.mxu0 0.0
    %582 = vmatpush.msra.mxu0 0.0
    %583 = vmatpush.msra.mxu0 0.0
    %584 = vmatpush.msra.mxu0 0.0
    %585 = vmatpush.msra.mxu0 0.0
    %586 = vmatpush.msra.mxu0 0.0
    %587 = vmatpush.msra.mxu0 0.0
    %588 = vmatpush.msra.mxu0 0.0
    %v589 = vand.u32 %v111, 4294901760
    %590 = vmatpush.msra.mxu0 %v589
    %v591 = vand.u32 %v110, 4294901760
    %592 = vmatpush.msra.mxu0 %v591
    %v593 = vand.u32 %v109, 4294901760
    %594 = vmatpush.msra.mxu0 %v593
    %v595 = vand.u32 %v108, 4294901760
    %596 = vmatpush.msra.mxu0 %v595
    %v597 = vand.u32 %v572, 4294901760
    %v598 = vsub.f32 %v572, %v597
    %v599 = vand.u32 %v598, 4294901760
    %v600 = vsub.f32 %v598, %v599
    %v601 = vand.u32 %v600, 4294901760
    %602 = vmatmul.f32.gmra.mxu0 %v601
    %v603 = vpop.f32.mrf.mxu0
    %v604 = vadd.f32 %v570, %v603
    %v605 = vand.u32 %v575, 4294901760
    %v606 = vsub.f32 %v575, %v605
    %v607 = vand.u32 %v606, 4294901760
    %v608 = vsub.f32 %v606, %v607
    %v609 = vand.u32 %v608, 4294901760
    %610 = vmatmul.f32.gmra.mxu0 %v609
    %v611 = vpop.f32.mrf.mxu0
    %v612 = vadd.f32 %v570, %v611
    %613 = vdwg.mxu0
    %614 = vmatpush.msra.mxu0 0.0
    %615 = vmatpush.msra.mxu0 0.0
    %616 = vmatpush.msra.mxu0 0.0
    %617 = vmatpush.msra.mxu0 0.0
    %618 = vmatpush.msra.mxu0 0.0
    %619 = vmatpush.msra.mxu0 0.0
    %620 = vmatpush.msra.mxu0 0.0
    %621 = vmatpush.msra.mxu0 0.0
    %622 = vmatpush.msra.mxu0 0.0
    %623 = vmatpush.msra.mxu0 0.0
    %624 = vmatpush.msra.mxu0 0.0
    %625 = vmatpush.msra.mxu0 0.0
    %v626 = vand.u32 %v111, 4294901760
    %v627 = vsub.f32 %v111, %v626
    %v628 = vand.u32 %v627, 4294901760
    %v629 = vsub.f32 %v627, %v628
    %v630 = vand.u32 %v629, 4294901760
    %631 = vmatpush.msra.mxu0 %v630
    %v632 = vand.u32 %v110, 4294901760
    %v633 = vsub.f32 %v110, %v632
    %v634 = vand.u32 %v633, 4294901760
    %v635 = vsub.f32 %v633, %v634
    %v636 = vand.u32 %v635, 4294901760
    %637 = vmatpush.msra.mxu0 %v636
    %v638 = vand.u32 %v109, 4294901760
    %v639 = vsub.f32 %v109, %v638
    %v640 = vand.u32 %v639, 4294901760
    %v641 = vsub.f32 %v639, %v640
    %v642 = vand.u32 %v641, 4294901760
    %643 = vmatpush.msra.mxu0 %v642
    %v644 = vand.u32 %v108, 4294901760
    %v645 = vsub.f32 %v108, %v644
    %v646 = vand.u32 %v645, 4294901760
    %v647 = vsub.f32 %v645, %v646
    %v648 = vand.u32 %v647, 4294901760
    %649 = vmatpush.msra.mxu0 %v648
    %v650 = vand.u32 %v572, 4294901760
    %651 = vmatmul.f32.gmra.mxu0 %v650
    %v652 = vpop.f32.mrf.mxu0
    %v653 = vadd.f32 %v604, %v652
    %v654 = vand.u32 %v575, 4294901760
    %655 = vmatmul.f32.gmra.mxu0 %v654
    %v656 = vpop.f32.mrf.mxu0
    %v657 = vadd.f32 %v612, %v656
    %658 = vdwg.mxu0
    %659 = vmatpush.msra.mxu0 0.0
    %660 = vmatpush.msra.mxu0 0.0
    %661 = vmatpush.msra.mxu0 0.0
    %662 = vmatpush.msra.mxu0 0.0
    %663 = vmatpush.msra.mxu0 0.0
    %664 = vmatpush.msra.mxu0 0.0
    %665 = vmatpush.msra.mxu0 0.0
    %666 = vmatpush.msra.mxu0 0.0
    %667 = vmatpush.msra.mxu0 0.0
    %668 = vmatpush.msra.mxu0 0.0
    %669 = vmatpush.msra.mxu0 0.0
    %670 = vmatpush.msra.mxu0 0.0
    %v671 = vand.u32 %v111, 4294901760
    %v672 = vsub.f32 %v111, %v671
    %673 = vmatpush.msra.mxu0 %v672
    %v674 = vand.u32 %v110, 4294901760
    %v675 = vsub.f32 %v110, %v674
    %676 = vmatpush.msra.mxu0 %v675
    %v677 = vand.u32 %v109, 4294901760
    %v678 = vsub.f32 %v109, %v677
    %679 = vmatpush.msra.mxu0 %v678
    %v680 = vand.u32 %v108, 4294901760
    %v681 = vsub.f32 %v108, %v680
    %682 = vmatpush.msra.mxu0 %v681
    %v683 = vand.u32 %v572, 4294901760
    %v684 = vsub.f32 %v572, %v683
    %685 = vmatmul.f32.gmra.mxu0 %v684
    %v686 = vpop.f32.mrf.mxu0
    %v687 = vadd.f32 %v653, %v686
    %v688 = vand.u32 %v575, 4294901760
    %v689 = vsub.f32 %v575, %v688
    %690 = vmatmul.f32.gmra.mxu0 %v689
    %v691 = vpop.f32.mrf.mxu0
    %v692 = vadd.f32 %v657, %v691
    %693 = vdwg.mxu0
    %694 = vmatpush.msra.mxu0 0.0
    %695 = vmatpush.msra.mxu0 0.0
    %696 = vmatpush.msra.mxu0 0.0
    %697 = vmatpush.msra.mxu0 0.0
    %698 = vmatpush.msra.mxu0 0.0
    %699 = vmatpush.msra.mxu0 0.0
    %700 = vmatpush.msra.mxu0 0.0
    %701 = vmatpush.msra.mxu0 0.0
    %702 = vmatpush.msra.mxu0 0.0
    %703 = vmatpush.msra.mxu0 0.0
    %704 = vmatpush.msra.mxu0 0.0
    %705 = vmatpush.msra.mxu0 0.0
    %v706 = vand.u32 %v111, 4294901760
    %707 = vmatpush.msra.mxu0 %v706
    %v708 = vand.u32 %v110, 4294901760
    %709 = vmatpush.msra.mxu0 %v708
    %v710 = vand.u32 %v109, 4294901760
    %711 = vmatpush.msra.mxu0 %v710
    %v712 = vand.u32 %v108, 4294901760
    %713 = vmatpush.msra.mxu0 %v712
    %v714 = vand.u32 %v572, 4294901760
    %v715 = vsub.f32 %v572, %v714
    %v716 = vand.u32 %v715, 4294901760
    %717 = vmatmul.f32.gmra.mxu0 %v716
    %v718 = vpop.f32.mrf.mxu0
    %v719 = vadd.f32 %v687, %v718
    %v720 = vand.u32 %v575, 4294901760
    %v721 = vsub.f32 %v575, %v720
    %v722 = vand.u32 %v721, 4294901760
    %723 = vmatmul.f32.gmra.mxu0 %v722
    %v724 = vpop.f32.mrf.mxu0
    %v725 = vadd.f32 %v692, %v724
    %726 = vdwg.mxu0
    %727 = vmatpush.msra.mxu0 0.0
    %728 = vmatpush.msra.mxu0 0.0
    %729 = vmatpush.msra.mxu0 0.0
    %730 = vmatpush.msra.mxu0 0.0
    %731 = vmatpush.msra.mxu0 0.0
    %732 = vmatpush.msra.mxu0 0.0
    %733 = vmatpush.msra.mxu0 0.0
    %734 = vmatpush.msra.mxu0 0.0
    %735 = vmatpush.msra.mxu0 0.0
    %736 = vmatpush.msra.mxu0 0.0
    %737 = vmatpush.msra.mxu0 0.0
    %738 = vmatpush.msra.mxu0 0.0
    %v739 = vand.u32 %v111, 4294901760
    %v740 = vsub.f32 %v111, %v739
    %v741 = vand.u32 %v740, 4294901760
    %742 = vmatpush.msra.mxu0 %v741
    %v743 = vand.u32 %v110, 4294901760
    %v744 = vsub.f32 %v110, %v743
    %v745 = vand.u32 %v744, 4294901760
    %746 = vmatpush.msra.mxu0 %v745
    %v747 = vand.u32 %v109, 4294901760
    %v748 = vsub.f32 %v109, %v747
    %v749 = vand.u32 %v748, 4294901760
    %750 = vmatpush.msra.mxu0 %v749
    %v751 = vand.u32 %v108, 4294901760
    %v752 = vsub.f32 %v108, %v751
    %v753 = vand.u32 %v752, 4294901760
    %754 = vmatpush.msra.mxu0 %v753
    %v755 = vand.u32 %v572, 4294901760
    %756 = vmatmul.f32.gmra.mxu0 %v755
    %v757 = vpop.f32.mrf.mxu0
    %v758 = vadd.f32 %v719, %v757
    %v759 = vand.u32 %v575, 4294901760
    %760 = vmatmul.f32.gmra.mxu0 %v759
    %v761 = vpop.f32.mrf.mxu0
    %v762 = vadd.f32 %v725, %v761
    %763 = vdwg.mxu0
    %764 = vmatpush.msra.mxu0 0.0
    %765 = vmatpush.msra.mxu0 0.0
    %766 = vmatpush.msra.mxu0 0.0
    %767 = vmatpush.msra.mxu0 0.0
    %768 = vmatpush.msra.mxu0 0.0
    %769 = vmatpush.msra.mxu0 0.0
    %770 = vmatpush.msra.mxu0 0.0
    %771 = vmatpush.msra.mxu0 0.0
    %772 = vmatpush.msra.mxu0 0.0
    %773 = vmatpush.msra.mxu0 0.0
    %774 = vmatpush.msra.mxu0 0.0
    %775 = vmatpush.msra.mxu0 0.0
    %v776 = vand.u32 %v111, 4294901760
    %777 = vmatpush.msra.mxu0 %v776
    %v778 = vand.u32 %v110, 4294901760
    %779 = vmatpush.msra.mxu0 %v778
    %v780 = vand.u32 %v109, 4294901760
    %781 = vmatpush.msra.mxu0 %v780
    %v782 = vand.u32 %v108, 4294901760
    %783 = vmatpush.msra.mxu0 %v782
    %v784 = vand.u32 %v572, 4294901760
    %785 = vmatmul.f32.gmra.mxu0 %v784
    %v786 = vpop.f32.mrf.mxu0
    %v787 = vadd.f32 %v758, %v786
    %v788 = vand.u32 %v575, 4294901760
    %789 = vmatmul.f32.gmra.mxu0 %v788
    %v790 = vpop.f32.mrf.mxu0
    %v791 = vadd.f32 %v762, %v790
    %792 = vdwg.mxu0
    %v793 = vlaneseq
    %v794 = vshrl.u32 %v793, 7
    %v795 = vadd.s32 %v794, 8
    %v796 = vadd.s32 %v794, 16
    %v797 = vadd.s32 %v794, 24
    %v798 = vadd.s32 %v794, 32
    %v799 = vadd.s32 %v794, 40
    %v800 = vadd.s32 %v794, 48
    %v801 = vadd.s32 %v794, 56
    %v802 = vlaneseq
    %v803 = vand.u32 %v802, 127
    %v804 = vshra.s32 %v794, 3
    %v805 = vshra.s32 %v795, 3
    %v806 = vshra.s32 %v796, 3
    %v807 = vshra.s32 %v797, 3
    %v808 = vshra.s32 %v798, 3
    %v809 = vshra.s32 %v799, 3
    %v810 = vshra.s32 %v800, 3
    %v811 = vshra.s32 %v801, 3
    %v812 = vand.u32 %v804, 1
    %v813 = vand.u32 %v805, 1
    %v814 = vand.u32 %v806, 1
    %v815 = vand.u32 %v807, 1
    %v816 = vand.u32 %v808, 1
    %v817 = vand.u32 %v809, 1
    %v818 = vand.u32 %v810, 1
    %v819 = vand.u32 %v811, 1
    %v820 = vand.u32 %v794, 7
    %v821 = vand.u32 %v795, 7
    %v822 = vand.u32 %v796, 7
    %v823 = vand.u32 %v797, 7
    %v824 = vand.u32 %v798, 7
    %v825 = vand.u32 %v799, 7
    %v826 = vand.u32 %v800, 7
    %v827 = vand.u32 %v801, 7
    %v828 = vshra.s32 %v803, 3
    %v829 = vand.u32 %v803, 7
    %vm830 = vcmp.eq.s32.totalorder %v812, %v828
    %vm831 = vcmp.eq.s32.totalorder %v813, %v828
    %vm832 = vcmp.eq.s32.totalorder %v814, %v828
    %vm833 = vcmp.eq.s32.totalorder %v815, %v828
    %vm834 = vcmp.eq.s32.totalorder %v816, %v828
    %vm835 = vcmp.eq.s32.totalorder %v817, %v828
    %vm836 = vcmp.eq.s32.totalorder %v818, %v828
    %vm837 = vcmp.eq.s32.totalorder %v819, %v828
    %v838 = vld [vmem:[%s0] sm:$0x1]
    %vm839 = vcmp.ne.s32.totalorder %v838, 0
    %vm840 = vcmp.le.s32.totalorder %v829, %v820
    %vm841 = vcmp.le.s32.totalorder %v829, %v821
    %vm842 = vcmp.le.s32.totalorder %v829, %v822
    %vm843 = vcmp.le.s32.totalorder %v829, %v823
    %vm844 = vcmp.le.s32.totalorder %v829, %v824
    %vm845 = vcmp.le.s32.totalorder %v829, %v825
    %vm846 = vcmp.le.s32.totalorder %v829, %v826
    %vm847 = vcmp.le.s32.totalorder %v829, %v827
    %v848 = vsel %vm839, 1, 0
    %v849 = vperm.slane %v848, 0
    %vm850 = vcmp.eq.s32.totalorder %v849, 1
    %vm851 = vmand %vm850, %vm840
    %vm852 = vmand %vm850, %vm841
    %vm853 = vmand %vm850, %vm842
    %vm854 = vmand %vm850, %vm843
    %vm855 = vmand %vm850, %vm844
    %vm856 = vmand %vm850, %vm845
    %vm857 = vmand %vm850, %vm846
    %vm858 = vmand %vm850, %vm847
    %v859 = vshra.s32 %v794, 4
    %v860 = vshra.s32 %v795, 4
    %v861 = vshra.s32 %v796, 4
    %v862 = vshra.s32 %v797, 4
    %v863 = vshra.s32 %v798, 4
    %v864 = vshra.s32 %v799, 4
    %v865 = vshra.s32 %v800, 4
    %v866 = vshra.s32 %v801, 4
    %vm867 = vcmp.eq.s32.totalorder %v859, %v828
    %vm868 = vcmp.eq.s32.totalorder %v860, %v828
    %vm869 = vcmp.eq.s32.totalorder %v861, %v828
    %vm870 = vcmp.eq.s32.totalorder %v862, %v828
    %vm871 = vcmp.eq.s32.totalorder %v863, %v828
    %vm872 = vcmp.eq.s32.totalorder %v864, %v828
    %vm873 = vcmp.eq.s32.totalorder %v865, %v828
    %vm874 = vcmp.eq.s32.totalorder %v866, %v828
    %v875 = vsel %vm867, %v341, 0.0
    %v876 = vsel %vm868, %v345, 0.0
    %v877 = vsel %vm869, %v341, 0.0
    %v878 = vsel %vm870, %v345, 0.0
    %v879 = vsel %vm871, %v341, 0.0
    %v880 = vsel %vm872, %v345, 0.0
    %v881 = vsel %vm873, %v341, 0.0
    %v882 = vsel %vm874, %v345, 0.0
    %v884 = vsel %vm124, %v875, 0
    %v887 = vsel %vm124, %v876, 0
    %v890 = vsel %vm124, %v877, 0
    %v893 = vsel %vm124, %v878, 0
    %v896 = vsel %vm124, %v879, 0
    %v899 = vsel %vm124, %v880, 0
    %v902 = vsel %vm124, %v881, 0
    %v905 = vsel %vm124, %v882, 0
    %v908 = vsel %vm124, %v564, 0
    %v911 = vsel %vm124, %v568, 0
    %913 = vmatpush.xpose.msra.mxu0 0.0
    %914 = vmatpush.xpose.msra.mxu0 0.0
    %915 = vmatpush.xpose.msra.mxu0 0.0
    %916 = vmatpush.xpose.msra.mxu0 0.0
    %917 = vmatpush.xpose.msra.mxu0 0.0
    %918 = vmatpush.xpose.msra.mxu0 0.0
    %919 = vmatpush.xpose.msra.mxu0 0.0
    %920 = vmatpush.xpose.msra.mxu0 0.0
    %921 = vmatpush.xpose.msra.mxu0 0.0
    %922 = vmatpush.xpose.msra.mxu0 0.0
    %923 = vmatpush.xpose.msra.mxu0 0.0
    %924 = vmatpush.xpose.msra.mxu0 0.0
    %925 = vmatpush.xpose.msra.mxu0 0.0
    %926 = vmatpush.xpose.msra.mxu0 0.0
    %v927 = vand.u32 %v911, 4294901760
    %928 = vmatpush.xpose.msra.mxu0 %v927
    %v929 = vand.u32 %v908, 4294901760
    %930 = vmatpush.xpose.msra.mxu0 %v929
    %v931 = vand.u32 %v884, 4294901760
    %v932 = vsub.f32 %v884, %v931
    %v933 = vand.u32 %v932, 4294901760
    %v934 = vsub.f32 %v932, %v933
    %v935 = vand.u32 %v934, 4294901760
    %936 = vmatmul.f32.gmra.mxu0 %v935
    %v937 = vpop.f32.mrf.mxu0
    %v938 = vadd.f32 0.0, %v937
    %v939 = vand.u32 %v887, 4294901760
    %v940 = vsub.f32 %v887, %v939
    %v941 = vand.u32 %v940, 4294901760
    %v942 = vsub.f32 %v940, %v941
    %v943 = vand.u32 %v942, 4294901760
    %944 = vmatmul.f32.gmra.mxu0 %v943
    %v945 = vpop.f32.mrf.mxu0
    %v946 = vadd.f32 0.0, %v945
    %v947 = vand.u32 %v890, 4294901760
    %v948 = vsub.f32 %v890, %v947
    %v949 = vand.u32 %v948, 4294901760
    %v950 = vsub.f32 %v948, %v949
    %v951 = vand.u32 %v950, 4294901760
    %952 = vmatmul.f32.gmra.mxu0 %v951
    %v953 = vpop.f32.mrf.mxu0
    %v954 = vadd.f32 0.0, %v953
    %v955 = vand.u32 %v893, 4294901760
    %v956 = vsub.f32 %v893, %v955
    %v957 = vand.u32 %v956, 4294901760
    %v958 = vsub.f32 %v956, %v957
    %v959 = vand.u32 %v958, 4294901760
    %960 = vmatmul.f32.gmra.mxu0 %v959
    %v961 = vpop.f32.mrf.mxu0
    %v962 = vadd.f32 0.0, %v961
    %v963 = vand.u32 %v896, 4294901760
    %v964 = vsub.f32 %v896, %v963
    %v965 = vand.u32 %v964, 4294901760
    %v966 = vsub.f32 %v964, %v965
    %v967 = vand.u32 %v966, 4294901760
    %968 = vmatmul.f32.gmra.mxu0 %v967
    %v969 = vpop.f32.mrf.mxu0
    %v970 = vadd.f32 0.0, %v969
    %v971 = vand.u32 %v899, 4294901760
    %v972 = vsub.f32 %v899, %v971
    %v973 = vand.u32 %v972, 4294901760
    %v974 = vsub.f32 %v972, %v973
    %v975 = vand.u32 %v974, 4294901760
    %976 = vmatmul.f32.gmra.mxu0 %v975
    %v977 = vpop.f32.mrf.mxu0
    %v978 = vadd.f32 0.0, %v977
    %v979 = vand.u32 %v902, 4294901760
    %v980 = vsub.f32 %v902, %v979
    %v981 = vand.u32 %v980, 4294901760
    %v982 = vsub.f32 %v980, %v981
    %v983 = vand.u32 %v982, 4294901760
    %984 = vmatmul.f32.gmra.mxu0 %v983
    %v985 = vpop.f32.mrf.mxu0
    %v986 = vadd.f32 0.0, %v985
    %v987 = vand.u32 %v905, 4294901760
    %v988 = vsub.f32 %v905, %v987
    %v989 = vand.u32 %v988, 4294901760
    %v990 = vsub.f32 %v988, %v989
    %v991 = vand.u32 %v990, 4294901760
    %992 = vmatmul.f32.gmra.mxu0 %v991
    %v993 = vpop.f32.mrf.mxu0
    %v994 = vadd.f32 0.0, %v993
    %995 = vdwg.mxu0
    %996 = vmatpush.xpose.msra.mxu0 0.0
    %997 = vmatpush.xpose.msra.mxu0 0.0
    %998 = vmatpush.xpose.msra.mxu0 0.0
    %999 = vmatpush.xpose.msra.mxu0 0.0
    %1000 = vmatpush.xpose.msra.mxu0 0.0
    %1001 = vmatpush.xpose.msra.mxu0 0.0
    %1002 = vmatpush.xpose.msra.mxu0 0.0
    %1003 = vmatpush.xpose.msra.mxu0 0.0
    %1004 = vmatpush.xpose.msra.mxu0 0.0
    %1005 = vmatpush.xpose.msra.mxu0 0.0
    %1006 = vmatpush.xpose.msra.mxu0 0.0
    %1007 = vmatpush.xpose.msra.mxu0 0.0
    %1008 = vmatpush.xpose.msra.mxu0 0.0
    %1009 = vmatpush.xpose.msra.mxu0 0.0
    %v1010 = vand.u32 %v911, 4294901760
    %v1011 = vsub.f32 %v911, %v1010
    %v1012 = vand.u32 %v1011, 4294901760
    %v1013 = vsub.f32 %v1011, %v1012
    %v1014 = vand.u32 %v1013, 4294901760
    %1015 = vmatpush.xpose.msra.mxu0 %v1014
    %v1016 = vand.u32 %v908, 4294901760
    %v1017 = vsub.f32 %v908, %v1016
    %v1018 = vand.u32 %v1017, 4294901760
    %v1019 = vsub.f32 %v1017, %v1018
    %v1020 = vand.u32 %v1019, 4294901760
    %1021 = vmatpush.xpose.msra.mxu0 %v1020
    %v1022 = vand.u32 %v884, 4294901760
    %1023 = vmatmul.f32.gmra.mxu0 %v1022
    %v1024 = vpop.f32.mrf.mxu0
    %v1025 = vadd.f32 %v938, %v1024
    %v1026 = vand.u32 %v887, 4294901760
    %1027 = vmatmul.f32.gmra.mxu0 %v1026
    %v1028 = vpop.f32.mrf.mxu0
    %v1029 = vadd.f32 %v946, %v1028
    %v1030 = vand.u32 %v890, 4294901760
    %1031 = vmatmul.f32.gmra.mxu0 %v1030
    %v1032 = vpop.f32.mrf.mxu0
    %v1033 = vadd.f32 %v954, %v1032
    %v1034 = vand.u32 %v893, 4294901760
    %1035 = vmatmul.f32.gmra.mxu0 %v1034
    %v1036 = vpop.f32.mrf.mxu0
    %v1037 = vadd.f32 %v962, %v1036
    %v1038 = vand.u32 %v896, 4294901760
    %1039 = vmatmul.f32.gmra.mxu0 %v1038
    %v1040 = vpop.f32.mrf.mxu0
    %v1041 = vadd.f32 %v970, %v1040
    %v1042 = vand.u32 %v899, 4294901760
    %1043 = vmatmul.f32.gmra.mxu0 %v1042
    %v1044 = vpop.f32.mrf.mxu0
    %v1045 = vadd.f32 %v978, %v1044
    %v1046 = vand.u32 %v902, 4294901760
    %1047 = vmatmul.f32.gmra.mxu0 %v1046
    %v1048 = vpop.f32.mrf.mxu0
    %v1049 = vadd.f32 %v986, %v1048
    %v1050 = vand.u32 %v905, 4294901760
    %1051 = vmatmul.f32.gmra.mxu0 %v1050
    %v1052 = vpop.f32.mrf.mxu0
    %v1053 = vadd.f32 %v994, %v1052
    %1054 = vdwg.mxu0
    %1055 = vmatpush.xpose.msra.mxu0 0.0
    %1056 = vmatpush.xpose.msra.mxu0 0.0
    %1057 = vmatpush.xpose.msra.mxu0 0.0
    %1058 = vmatpush.xpose.msra.mxu0 0.0
    %1059 = vmatpush.xpose.msra.mxu0 0.0
    %1060 = vmatpush.xpose.msra.mxu0 0.0
    %1061 = vmatpush.xpose.msra.mxu0 0.0
    %1062 = vmatpush.xpose.msra.mxu0 0.0
    %1063 = vmatpush.xpose.msra.mxu0 0.0
    %1064 = vmatpush.xpose.msra.mxu0 0.0
    %1065 = vmatpush.xpose.msra.mxu0 0.0
    %1066 = vmatpush.xpose.msra.mxu0 0.0
    %1067 = vmatpush.xpose.msra.mxu0 0.0
    %1068 = vmatpush.xpose.msra.mxu0 0.0
    %v1069 = vand.u32 %v911, 4294901760
    %v1070 = vsub.f32 %v911, %v1069
    %1071 = vmatpush.xpose.msra.mxu0 %v1070
    %v1072 = vand.u32 %v908, 4294901760
    %v1073 = vsub.f32 %v908, %v1072
    %1074 = vmatpush.xpose.msra.mxu0 %v1073
    %v1075 = vand.u32 %v884, 4294901760
    %v1076 = vsub.f32 %v884, %v1075
    %1077 = vmatmul.f32.gmra.mxu0 %v1076
    %v1078 = vpop.f32.mrf.mxu0
    %v1079 = vadd.f32 %v1025, %v1078
    %v1080 = vand.u32 %v887, 4294901760
    %v1081 = vsub.f32 %v887, %v1080
    %1082 = vmatmul.f32.gmra.mxu0 %v1081
    %v1083 = vpop.f32.mrf.mxu0
    %v1084 = vadd.f32 %v1029, %v1083
    %v1085 = vand.u32 %v890, 4294901760
    %v1086 = vsub.f32 %v890, %v1085
    %1087 = vmatmul.f32.gmra.mxu0 %v1086
    %v1088 = vpop.f32.mrf.mxu0
    %v1089 = vadd.f32 %v1033, %v1088
    %v1090 = vand.u32 %v893, 4294901760
    %v1091 = vsub.f32 %v893, %v1090
    %1092 = vmatmul.f32.gmra.mxu0 %v1091
    %v1093 = vpop.f32.mrf.mxu0
    %v1094 = vadd.f32 %v1037, %v1093
    %v1095 = vand.u32 %v896, 4294901760
    %v1096 = vsub.f32 %v896, %v1095
    %1097 = vmatmul.f32.gmra.mxu0 %v1096
    %v1098 = vpop.f32.mrf.mxu0
    %v1099 = vadd.f32 %v1041, %v1098
    %v1100 = vand.u32 %v899, 4294901760
    %v1101 = vsub.f32 %v899, %v1100
    %1102 = vmatmul.f32.gmra.mxu0 %v1101
    %v1103 = vpop.f32.mrf.mxu0
    %v1104 = vadd.f32 %v1045, %v1103
    %v1105 = vand.u32 %v902, 4294901760
    %v1106 = vsub.f32 %v902, %v1105
    %1107 = vmatmul.f32.gmra.mxu0 %v1106
    %v1108 = vpop.f32.mrf.mxu0
    %v1109 = vadd.f32 %v1049, %v1108
    %v1110 = vand.u32 %v905, 4294901760
    %v1111 = vsub.f32 %v905, %v1110
    %1112 = vmatmul.f32.gmra.mxu0 %v1111
    %v1113 = vpop.f32.mrf.mxu0
    %v1114 = vadd.f32 %v1053, %v1113
    %1115 = vdwg.mxu0
    %1116 = vmatpush.xpose.msra.mxu0 0.0
    %1117 = vmatpush.xpose.msra.mxu0 0.0
    %1118 = vmatpush.xpose.msra.mxu0 0.0
    %1119 = vmatpush.xpose.msra.mxu0 0.0
    %1120 = vmatpush.xpose.msra.mxu0 0.0
    %1121 = vmatpush.xpose.msra.mxu0 0.0
    %1122 = vmatpush.xpose.msra.mxu0 0.0
    %1123 = vmatpush.xpose.msra.mxu0 0.0
    %1124 = vmatpush.xpose.msra.mxu0 0.0
    %1125 = vmatpush.xpose.msra.mxu0 0.0
    %1126 = vmatpush.xpose.msra.mxu0 0.0
    %1127 = vmatpush.xpose.msra.mxu0 0.0
    %1128 = vmatpush.xpose.msra.mxu0 0.0
    %1129 = vmatpush.xpose.msra.mxu0 0.0
    %v1130 = vand.u32 %v911, 4294901760
    %1131 = vmatpush.xpose.msra.mxu0 %v1130
    %v1132 = vand.u32 %v908, 4294901760
    %1133 = vmatpush.xpose.msra.mxu0 %v1132
    %v1134 = vand.u32 %v884, 4294901760
    %v1135 = vsub.f32 %v884, %v1134
    %v1136 = vand.u32 %v1135, 4294901760
    %1137 = vmatmul.f32.gmra.mxu0 %v1136
    %v1138 = vpop.f32.mrf.mxu0
    %v1139 = vadd.f32 %v1079, %v1138
    %v1140 = vand.u32 %v887, 4294901760
    %v1141 = vsub.f32 %v887, %v1140
    %v1142 = vand.u32 %v1141, 4294901760
    %1143 = vmatmul.f32.gmra.mxu0 %v1142
    %v1144 = vpop.f32.mrf.mxu0
    %v1145 = vadd.f32 %v1084, %v1144
    %v1146 = vand.u32 %v890, 4294901760
    %v1147 = vsub.f32 %v890, %v1146
    %v1148 = vand.u32 %v1147, 4294901760
    %1149 = vmatmul.f32.gmra.mxu0 %v1148
    %v1150 = vpop.f32.mrf.mxu0
    %v1151 = vadd.f32 %v1089, %v1150
    %v1152 = vand.u32 %v893, 4294901760
    %v1153 = vsub.f32 %v893, %v1152
    %v1154 = vand.u32 %v1153, 4294901760
    %1155 = vmatmul.f32.gmra.mxu0 %v1154
    %v1156 = vpop.f32.mrf.mxu0
    %v1157 = vadd.f32 %v1094, %v1156
    %v1158 = vand.u32 %v896, 4294901760
    %v1159 = vsub.f32 %v896, %v1158
    %v1160 = vand.u32 %v1159, 4294901760
    %1161 = vmatmul.f32.gmra.mxu0 %v1160
    %v1162 = vpop.f32.mrf.mxu0
    %v1163 = vadd.f32 %v1099, %v1162
    %v1164 = vand.u32 %v899, 4294901760
    %v1165 = vsub.f32 %v899, %v1164
    %v1166 = vand.u32 %v1165, 4294901760
    %1167 = vmatmul.f32.gmra.mxu0 %v1166
    %v1168 = vpop.f32.mrf.mxu0
    %v1169 = vadd.f32 %v1104, %v1168
    %v1170 = vand.u32 %v902, 4294901760
    %v1171 = vsub.f32 %v902, %v1170
    %v1172 = vand.u32 %v1171, 4294901760
    %1173 = vmatmul.f32.gmra.mxu0 %v1172
    %v1174 = vpop.f32.mrf.mxu0
    %v1175 = vadd.f32 %v1109, %v1174
    %v1176 = vand.u32 %v905, 4294901760
    %v1177 = vsub.f32 %v905, %v1176
    %v1178 = vand.u32 %v1177, 4294901760
    %1179 = vmatmul.f32.gmra.mxu0 %v1178
    %v1180 = vpop.f32.mrf.mxu0
    %v1181 = vadd.f32 %v1114, %v1180
    %1182 = vdwg.mxu0
    %1183 = vmatpush.xpose.msra.mxu0 0.0
    %1184 = vmatpush.xpose.msra.mxu0 0.0
    %1185 = vmatpush.xpose.msra.mxu0 0.0
    %1186 = vmatpush.xpose.msra.mxu0 0.0
    %1187 = vmatpush.xpose.msra.mxu0 0.0
    %1188 = vmatpush.xpose.msra.mxu0 0.0
    %1189 = vmatpush.xpose.msra.mxu0 0.0
    %1190 = vmatpush.xpose.msra.mxu0 0.0
    %1191 = vmatpush.xpose.msra.mxu0 0.0
    %1192 = vmatpush.xpose.msra.mxu0 0.0
    %1193 = vmatpush.xpose.msra.mxu0 0.0
    %1194 = vmatpush.xpose.msra.mxu0 0.0
    %1195 = vmatpush.xpose.msra.mxu0 0.0
    %1196 = vmatpush.xpose.msra.mxu0 0.0
    %v1197 = vand.u32 %v911, 4294901760
    %v1198 = vsub.f32 %v911, %v1197
    %v1199 = vand.u32 %v1198, 4294901760
    %1200 = vmatpush.xpose.msra.mxu0 %v1199
    %v1201 = vand.u32 %v908, 4294901760
    %v1202 = vsub.f32 %v908, %v1201
    %v1203 = vand.u32 %v1202, 4294901760
    %1204 = vmatpush.xpose.msra.mxu0 %v1203
    %v1205 = vand.u32 %v884, 4294901760
    %1206 = vmatmul.f32.gmra.mxu0 %v1205
    %v1207 = vpop.f32.mrf.mxu0
    %v1208 = vadd.f32 %v1139, %v1207
    %v1209 = vand.u32 %v887, 4294901760
    %1210 = vmatmul.f32.gmra.mxu0 %v1209
    %v1211 = vpop.f32.mrf.mxu0
    %v1212 = vadd.f32 %v1145, %v1211
    %v1213 = vand.u32 %v890, 4294901760
    %1214 = vmatmul.f32.gmra.mxu0 %v1213
    %v1215 = vpop.f32.mrf.mxu0
    %v1216 = vadd.f32 %v1151, %v1215
    %v1217 = vand.u32 %v893, 4294901760
    %1218 = vmatmul.f32.gmra.mxu0 %v1217
    %v1219 = vpop.f32.mrf.mxu0
    %v1220 = vadd.f32 %v1157, %v1219
    %v1221 = vand.u32 %v896, 4294901760
    %1222 = vmatmul.f32.gmra.mxu0 %v1221
    %v1223 = vpop.f32.mrf.mxu0
    %v1224 = vadd.f32 %v1163, %v1223
    %v1225 = vand.u32 %v899, 4294901760
    %1226 = vmatmul.f32.gmra.mxu0 %v1225
    %v1227 = vpop.f32.mrf.mxu0
    %v1228 = vadd.f32 %v1169, %v1227
    %v1229 = vand.u32 %v902, 4294901760
    %1230 = vmatmul.f32.gmra.mxu0 %v1229
    %v1231 = vpop.f32.mrf.mxu0
    %v1232 = vadd.f32 %v1175, %v1231
    %v1233 = vand.u32 %v905, 4294901760
    %1234 = vmatmul.f32.gmra.mxu0 %v1233
    %v1235 = vpop.f32.mrf.mxu0
    %v1236 = vadd.f32 %v1181, %v1235
    %1237 = vdwg.mxu0
    %1238 = vmatpush.xpose.msra.mxu0 0.0
    %1239 = vmatpush.xpose.msra.mxu0 0.0
    %1240 = vmatpush.xpose.msra.mxu0 0.0
    %1241 = vmatpush.xpose.msra.mxu0 0.0
    %1242 = vmatpush.xpose.msra.mxu0 0.0
    %1243 = vmatpush.xpose.msra.mxu0 0.0
    %1244 = vmatpush.xpose.msra.mxu0 0.0
    %1245 = vmatpush.xpose.msra.mxu0 0.0
    %1246 = vmatpush.xpose.msra.mxu0 0.0
    %1247 = vmatpush.xpose.msra.mxu0 0.0
    %1248 = vmatpush.xpose.msra.mxu0 0.0
    %1249 = vmatpush.xpose.msra.mxu0 0.0
    %1250 = vmatpush.xpose.msra.mxu0 0.0
    %1251 = vmatpush.xpose.msra.mxu0 0.0
    %v1252 = vand.u32 %v911, 4294901760
    %1253 = vmatpush.xpose.msra.mxu0 %v1252
    %v1254 = vand.u32 %v908, 4294901760
    %1255 = vmatpush.xpose.msra.mxu0 %v1254
    %v1256 = vand.u32 %v884, 4294901760
    %1257 = vmatmul.f32.gmra.mxu0 %v1256
    %v1258 = vpop.f32.mrf.mxu0
    %v1259 = vadd.f32 %v1208, %v1258
    %v1260 = vand.u32 %v887, 4294901760
    %1261 = vmatmul.f32.gmra.mxu0 %v1260
    %v1262 = vpop.f32.mrf.mxu0
    %v1263 = vadd.f32 %v1212, %v1262
    %v1264 = vand.u32 %v890, 4294901760
    %1265 = vmatmul.f32.gmra.mxu0 %v1264
    %v1266 = vpop.f32.mrf.mxu0
    %v1267 = vadd.f32 %v1216, %v1266
    %v1268 = vand.u32 %v893, 4294901760
    %1269 = vmatmul.f32.gmra.mxu0 %v1268
    %v1270 = vpop.f32.mrf.mxu0
    %v1271 = vadd.f32 %v1220, %v1270
    %v1272 = vand.u32 %v896, 4294901760
    %1273 = vmatmul.f32.gmra.mxu0 %v1272
    %v1274 = vpop.f32.mrf.mxu0
    %v1275 = vadd.f32 %v1224, %v1274
    %v1276 = vand.u32 %v899, 4294901760
    %1277 = vmatmul.f32.gmra.mxu0 %v1276
    %v1278 = vpop.f32.mrf.mxu0
    %v1279 = vadd.f32 %v1228, %v1278
    %v1280 = vand.u32 %v902, 4294901760
    %1281 = vmatmul.f32.gmra.mxu0 %v1280
    %v1282 = vpop.f32.mrf.mxu0
    %v1283 = vadd.f32 %v1232, %v1282
    %v1284 = vand.u32 %v905, 4294901760
    %1285 = vmatmul.f32.gmra.mxu0 %v1284
    %v1286 = vpop.f32.mrf.mxu0
    %v1287 = vadd.f32 %v1236, %v1286
    %1288 = vdwg.mxu0
    %v1289 = vmul.f32 %v1259, 0.35355338
    %v1290 = vmul.f32 %v1263, 0.35355338
    %v1291 = vmul.f32 %v1267, 0.35355338
    %v1292 = vmul.f32 %v1271, 0.35355338
    %v1293 = vmul.f32 %v1275, 0.35355338
    %v1294 = vmul.f32 %v1279, 0.35355338
    %v1295 = vmul.f32 %v1283, 0.35355338
    %v1296 = vmul.f32 %v1287, 0.35355338
    %v1297 = vsel %vm851, %v1289, -1e+30
    %v1298 = vsel %vm852, %v1290, -1e+30
    %v1299 = vsel %vm853, %v1291, -1e+30
    %v1300 = vsel %vm854, %v1292, -1e+30
    %v1301 = vsel %vm855, %v1293, -1e+30
    %v1302 = vsel %vm856, %v1294, -1e+30
    %v1303 = vsel %vm857, %v1295, -1e+30
    %v1304 = vsel %vm858, %v1296, -1e+30
    %v1305 = vsel %vm830, %v1297, -1e+32
    %v1306 = vsel %vm831, %v1298, -1e+32
    %v1307 = vsel %vm832, %v1299, -1e+32
    %v1308 = vsel %vm833, %v1300, -1e+32
    %v1309 = vsel %vm834, %v1301, -1e+32
    %v1310 = vsel %vm835, %v1302, -1e+32
    %v1311 = vsel %vm836, %v1303, -1e+32
    %v1312 = vsel %vm837, %v1304, -1e+32
    %vm1313 = vcmask 130048
    %v1314 = vsel %vm1313, %v1305, -inf
    %1315 = vmax.xlane.f32.xlu0 %v1314
    %v1316 = vpop.xlane.xlu0 %1315
    %v1317 = vsel %vm1313, %v1306, -inf
    %1318 = vmax.xlane.f32.xlu0 %v1317
    %v1319 = vpop.xlane.xlu0 %1318
    %v1320 = vsel %vm1313, %v1307, -inf
    %1321 = vmax.xlane.f32.xlu0 %v1320
    %v1322 = vpop.xlane.xlu0 %1321
    %v1323 = vsel %vm1313, %v1308, -inf
    %1324 = vmax.xlane.f32.xlu0 %v1323
    %v1325 = vpop.xlane.xlu0 %1324
    %v1326 = vsel %vm1313, %v1309, -inf
    %1327 = vmax.xlane.f32.xlu0 %v1326
    %v1328 = vpop.xlane.xlu0 %1327
    %v1329 = vsel %vm1313, %v1310, -inf
    %1330 = vmax.xlane.f32.xlu0 %v1329
    %v1331 = vpop.xlane.xlu0 %1330
    %v1332 = vsel %vm1313, %v1311, -inf
    %1333 = vmax.xlane.f32.xlu0 %v1332
    %v1334 = vpop.xlane.xlu0 %1333
    %v1335 = vsel %vm1313, %v1312, -inf
    %1336 = vmax.xlane.f32.xlu0 %v1335
    %v1337 = vpop.xlane.xlu0 %1336
    %v1338 = vsub.f32 %v1305, %v1316
    %v1339 = vsub.f32 %v1306, %v1319
    %v1340 = vsub.f32 %v1307, %v1322
    %v1341 = vsub.f32 %v1308, %v1325
    %v1342 = vsub.f32 %v1309, %v1328
    %v1343 = vsub.f32 %v1310, %v1331
    %v1344 = vsub.f32 %v1311, %v1334
    %v1345 = vsub.f32 %v1312, %v1337
    %v1346 = vmul.f32 %v1338, 1.442695
    %v1347 = vpow.pop %v1346
    %v1348 = vmul.f32 %v1339, 1.442695
    %v1349 = vpow.pop %v1348
    %v1350 = vmul.f32 %v1340, 1.442695
    %v1351 = vpow.pop %v1350
    %v1352 = vmul.f32 %v1341, 1.442695
    %v1353 = vpow.pop %v1352
    %v1354 = vmul.f32 %v1342, 1.442695
    %v1355 = vpow.pop %v1354
    %v1356 = vmul.f32 %v1343, 1.442695
    %v1357 = vpow.pop %v1356
    %v1358 = vmul.f32 %v1344, 1.442695
    %v1359 = vpow.pop %v1358
    %v1360 = vmul.f32 %v1345, 1.442695
    %v1361 = vpow.pop %v1360
    %v1362 = vsel %vm1313, %v1347, 0.0
    %1363 = vadd.xlane.f32.xlu0 %v1362
    %v1364 = vpop.xlane.xlu0 %1363
    %v1365 = vsel %vm1313, %v1349, 0.0
    %1366 = vadd.xlane.f32.xlu0 %v1365
    %v1367 = vpop.xlane.xlu0 %1366
    %v1368 = vsel %vm1313, %v1351, 0.0
    %1369 = vadd.xlane.f32.xlu0 %v1368
    %v1370 = vpop.xlane.xlu0 %1369
    %v1371 = vsel %vm1313, %v1353, 0.0
    %1372 = vadd.xlane.f32.xlu0 %v1371
    %v1373 = vpop.xlane.xlu0 %1372
    %v1374 = vsel %vm1313, %v1355, 0.0
    %1375 = vadd.xlane.f32.xlu0 %v1374
    %v1376 = vpop.xlane.xlu0 %1375
    %v1377 = vsel %vm1313, %v1357, 0.0
    %1378 = vadd.xlane.f32.xlu0 %v1377
    %v1379 = vpop.xlane.xlu0 %1378
    %v1380 = vsel %vm1313, %v1359, 0.0
    %1381 = vadd.xlane.f32.xlu0 %v1380
    %v1382 = vpop.xlane.xlu0 %1381
    %v1383 = vsel %vm1313, %v1361, 0.0
    %1384 = vadd.xlane.f32.xlu0 %v1383
    %v1385 = vpop.xlane.xlu0 %1384
    %v1386 = vrcp.pop %v1364
    %v1387 = vmul.f32 %v1364, %v1386
    %v1388 = vsub.f32 1.0, %v1387
    %v1389 = vmul.f32 %v1386, %v1388
    %v1390 = vadd.f32 %v1386, %v1389
    %vm1391 = vweird.f32 %v1364
    %vm1392 = vweird.f32 %v1386
    %vm1393 = vmor %vm1391, %vm1392
    %v1394 = vsel %vm1393, %v1386, %v1390
    %v1395 = vand.u32 2147483647, %v1364
    %vm1396 = vcmp.eq.f32.partialorder %v1395, 8.507059e+37
    %v1397 = vand.u32 %v1364, 2147483648
    %v1398 = vor.u32 1.1754944e-38, %v1397
    %v1399 = vsel %vm1396, %v1398, %v1394
    %v1400 = vmul.f32 %v1347, %v1399
    %v1401 = vrcp.pop %v1367
    %v1402 = vmul.f32 %v1367, %v1401
    %v1403 = vsub.f32 1.0, %v1402
    %v1404 = vmul.f32 %v1401, %v1403
    %v1405 = vadd.f32 %v1401, %v1404
    %vm1406 = vweird.f32 %v1367
    %vm1407 = vweird.f32 %v1401
    %vm1408 = vmor %vm1406, %vm1407
    %v1409 = vsel %vm1408, %v1401, %v1405
    %v1410 = vand.u32 2147483647, %v1367
    %vm1411 = vcmp.eq.f32.partialorder %v1410, 8.507059e+37
    %v1412 = vand.u32 %v1367, 2147483648
    %v1413 = vor.u32 1.1754944e-38, %v1412
    %v1414 = vsel %vm1411, %v1413, %v1409
    %v1415 = vmul.f32 %v1349, %v1414
    %v1416 = vrcp.pop %v1370
    %v1417 = vmul.f32 %v1370, %v1416
    %v1418 = vsub.f32 1.0, %v1417
    %v1419 = vmul.f32 %v1416, %v1418
    %v1420 = vadd.f32 %v1416, %v1419
    %vm1421 = vweird.f32 %v1370
    %vm1422 = vweird.f32 %v1416
    %vm1423 = vmor %vm1421, %vm1422
    %v1424 = vsel %vm1423, %v1416, %v1420
    %v1425 = vand.u32 2147483647, %v1370
    %vm1426 = vcmp.eq.f32.partialorder %v1425, 8.507059e+37
    %v1427 = vand.u32 %v1370, 2147483648
    %v1428 = vor.u32 1.1754944e-38, %v1427
    %v1429 = vsel %vm1426, %v1428, %v1424
    %v1430 = vmul.f32 %v1351, %v1429
    %v1431 = vrcp.pop %v1373
    %v1432 = vmul.f32 %v1373, %v1431
    %v1433 = vsub.f32 1.0, %v1432
    %v1434 = vmul.f32 %v1431, %v1433
    %v1435 = vadd.f32 %v1431, %v1434
    %vm1436 = vweird.f32 %v1373
    %vm1437 = vweird.f32 %v1431
    %vm1438 = vmor %vm1436, %vm1437
    %v1439 = vsel %vm1438, %v1431, %v1435
    %v1440 = vand.u32 2147483647, %v1373
    %vm1441 = vcmp.eq.f32.partialorder %v1440, 8.507059e+37
    %v1442 = vand.u32 %v1373, 2147483648
    %v1443 = vor.u32 1.1754944e-38, %v1442
    %v1444 = vsel %vm1441, %v1443, %v1439
    %v1445 = vmul.f32 %v1353, %v1444
    %v1446 = vrcp.pop %v1376
    %v1447 = vmul.f32 %v1376, %v1446
    %v1448 = vsub.f32 1.0, %v1447
    %v1449 = vmul.f32 %v1446, %v1448
    %v1450 = vadd.f32 %v1446, %v1449
    %vm1451 = vweird.f32 %v1376
    %vm1452 = vweird.f32 %v1446
    %vm1453 = vmor %vm1451, %vm1452
    %v1454 = vsel %vm1453, %v1446, %v1450
    %v1455 = vand.u32 2147483647, %v1376
    %vm1456 = vcmp.eq.f32.partialorder %v1455, 8.507059e+37
    %v1457 = vand.u32 %v1376, 2147483648
    %v1458 = vor.u32 1.1754944e-38, %v1457
    %v1459 = vsel %vm1456, %v1458, %v1454
    %v1460 = vmul.f32 %v1355, %v1459
    %v1461 = vrcp.pop %v1379
    %v1462 = vmul.f32 %v1379, %v1461
    %v1463 = vsub.f32 1.0, %v1462
    %v1464 = vmul.f32 %v1461, %v1463
    %v1465 = vadd.f32 %v1461, %v1464
    %vm1466 = vweird.f32 %v1379
    %vm1467 = vweird.f32 %v1461
    %vm1468 = vmor %vm1466, %vm1467
    %v1469 = vsel %vm1468, %v1461, %v1465
    %v1470 = vand.u32 2147483647, %v1379
    %vm1471 = vcmp.eq.f32.partialorder %v1470, 8.507059e+37
    %v1472 = vand.u32 %v1379, 2147483648
    %v1473 = vor.u32 1.1754944e-38, %v1472
    %v1474 = vsel %vm1471, %v1473, %v1469
    %v1475 = vmul.f32 %v1357, %v1474
    %v1476 = vrcp.pop %v1382
    %v1477 = vmul.f32 %v1382, %v1476
    %v1478 = vsub.f32 1.0, %v1477
    %v1479 = vmul.f32 %v1476, %v1478
    %v1480 = vadd.f32 %v1476, %v1479
    %vm1481 = vweird.f32 %v1382
    %vm1482 = vweird.f32 %v1476
    %vm1483 = vmor %vm1481, %vm1482
    %v1484 = vsel %vm1483, %v1476, %v1480
    %v1485 = vand.u32 2147483647, %v1382
    %vm1486 = vcmp.eq.f32.partialorder %v1485, 8.507059e+37
    %v1487 = vand.u32 %v1382, 2147483648
    %v1488 = vor.u32 1.1754944e-38, %v1487
    %v1489 = vsel %vm1486, %v1488, %v1484
    %v1490 = vmul.f32 %v1359, %v1489
    %v1491 = vrcp.pop %v1385
    %v1492 = vmul.f32 %v1385, %v1491
    %v1493 = vsub.f32 1.0, %v1492
    %v1494 = vmul.f32 %v1491, %v1493
    %v1495 = vadd.f32 %v1491, %v1494
    %vm1496 = vweird.f32 %v1385
    %vm1497 = vweird.f32 %v1491
    %vm1498 = vmor %vm1496, %vm1497
    %v1499 = vsel %vm1498, %v1491, %v1495
    %v1500 = vand.u32 2147483647, %v1385
    %vm1501 = vcmp.eq.f32.partialorder %v1500, 8.507059e+37
    %v1502 = vand.u32 %v1385, 2147483648
    %v1503 = vor.u32 1.1754944e-38, %v1502
    %v1504 = vsel %vm1501, %v1503, %v1499
    %v1505 = vmul.f32 %v1361, %v1504
    %v1507 = vsel %vm1313, %v1400, 0
    %v1510 = vsel %vm1313, %v1415, 0
    %v1513 = vsel %vm1313, %v1430, 0
    %v1516 = vsel %vm1313, %v1445, 0
    %v1519 = vsel %vm1313, %v1460, 0
    %v1522 = vsel %vm1313, %v1475, 0
    %v1525 = vsel %vm1313, %v1490, 0
    %v1528 = vsel %vm1313, %v1505, 0
    %1530 = vmatpush.msra.mxu0 0.0
    %1531 = vmatpush.msra.mxu0 0.0
    %1532 = vmatpush.msra.mxu0 0.0
    %1533 = vmatpush.msra.mxu0 0.0
    %1534 = vmatpush.msra.mxu0 0.0
    %1535 = vmatpush.msra.mxu0 0.0
    %1536 = vmatpush.msra.mxu0 0.0
    %1537 = vmatpush.msra.mxu0 0.0
    %1538 = vmatpush.msra.mxu0 0.0
    %1539 = vmatpush.msra.mxu0 0.0
    %1540 = vmatpush.msra.mxu0 0.0
    %1541 = vmatpush.msra.mxu0 0.0
    %1542 = vmatpush.msra.mxu0 0.0
    %1543 = vmatpush.msra.mxu0 0.0
    %v1544 = vand.u32 %v791, 4294901760
    %1545 = vmatpush.msra.mxu0 %v1544
    %v1546 = vand.u32 %v787, 4294901760
    %1547 = vmatpush.msra.mxu0 %v1546
    %v1548 = vand.u32 %v1507, 4294901760
    %v1549 = vsub.f32 %v1507, %v1548
    %v1550 = vand.u32 %v1549, 4294901760
    %v1551 = vsub.f32 %v1549, %v1550
    %v1552 = vand.u32 %v1551, 4294901760
    %1553 = vmatmul.f32.gmra.mxu0 %v1552
    %v1554 = vpop.f32.mrf.mxu0
    %v1555 = vadd.f32 0.0, %v1554
    %v1556 = vand.u32 %v1510, 4294901760
    %v1557 = vsub.f32 %v1510, %v1556
    %v1558 = vand.u32 %v1557, 4294901760
    %v1559 = vsub.f32 %v1557, %v1558
    %v1560 = vand.u32 %v1559, 4294901760
    %1561 = vmatmul.f32.gmra.mxu0 %v1560
    %v1562 = vpop.f32.mrf.mxu0
    %v1563 = vadd.f32 0.0, %v1562
    %v1564 = vand.u32 %v1513, 4294901760
    %v1565 = vsub.f32 %v1513, %v1564
    %v1566 = vand.u32 %v1565, 4294901760
    %v1567 = vsub.f32 %v1565, %v1566
    %v1568 = vand.u32 %v1567, 4294901760
    %1569 = vmatmul.f32.gmra.mxu0 %v1568
    %v1570 = vpop.f32.mrf.mxu0
    %v1571 = vadd.f32 0.0, %v1570
    %v1572 = vand.u32 %v1516, 4294901760
    %v1573 = vsub.f32 %v1516, %v1572
    %v1574 = vand.u32 %v1573, 4294901760
    %v1575 = vsub.f32 %v1573, %v1574
    %v1576 = vand.u32 %v1575, 4294901760
    %1577 = vmatmul.f32.gmra.mxu0 %v1576
    %v1578 = vpop.f32.mrf.mxu0
    %v1579 = vadd.f32 0.0, %v1578
    %v1580 = vand.u32 %v1519, 4294901760
    %v1581 = vsub.f32 %v1519, %v1580
    %v1582 = vand.u32 %v1581, 4294901760
    %v1583 = vsub.f32 %v1581, %v1582
    %v1584 = vand.u32 %v1583, 4294901760
    %1585 = vmatmul.f32.gmra.mxu0 %v1584
    %v1586 = vpop.f32.mrf.mxu0
    %v1587 = vadd.f32 0.0, %v1586
    %v1588 = vand.u32 %v1522, 4294901760
    %v1589 = vsub.f32 %v1522, %v1588
    %v1590 = vand.u32 %v1589, 4294901760
    %v1591 = vsub.f32 %v1589, %v1590
    %v1592 = vand.u32 %v1591, 4294901760
    %1593 = vmatmul.f32.gmra.mxu0 %v1592
    %v1594 = vpop.f32.mrf.mxu0
    %v1595 = vadd.f32 0.0, %v1594
    %v1596 = vand.u32 %v1525, 4294901760
    %v1597 = vsub.f32 %v1525, %v1596
    %v1598 = vand.u32 %v1597, 4294901760
    %v1599 = vsub.f32 %v1597, %v1598
    %v1600 = vand.u32 %v1599, 4294901760
    %1601 = vmatmul.f32.gmra.mxu0 %v1600
    %v1602 = vpop.f32.mrf.mxu0
    %v1603 = vadd.f32 0.0, %v1602
    %v1604 = vand.u32 %v1528, 4294901760
    %v1605 = vsub.f32 %v1528, %v1604
    %v1606 = vand.u32 %v1605, 4294901760
    %v1607 = vsub.f32 %v1605, %v1606
    %v1608 = vand.u32 %v1607, 4294901760
    %1609 = vmatmul.f32.gmra.mxu0 %v1608
    %v1610 = vpop.f32.mrf.mxu0
    %v1611 = vadd.f32 0.0, %v1610
    %1612 = vdwg.mxu0
    %1613 = vmatpush.msra.mxu0 0.0
    %1614 = vmatpush.msra.mxu0 0.0
    %1615 = vmatpush.msra.mxu0 0.0
    %1616 = vmatpush.msra.mxu0 0.0
    %1617 = vmatpush.msra.mxu0 0.0
    %1618 = vmatpush.msra.mxu0 0.0
    %1619 = vmatpush.msra.mxu0 0.0
    %1620 = vmatpush.msra.mxu0 0.0
    %1621 = vmatpush.msra.mxu0 0.0
    %1622 = vmatpush.msra.mxu0 0.0
    %1623 = vmatpush.msra.mxu0 0.0
    %1624 = vmatpush.msra.mxu0 0.0
    %1625 = vmatpush.msra.mxu0 0.0
    %1626 = vmatpush.msra.mxu0 0.0
    %v1627 = vand.u32 %v791, 4294901760
    %v1628 = vsub.f32 %v791, %v1627
    %v1629 = vand.u32 %v1628, 4294901760
    %v1630 = vsub.f32 %v1628, %v1629
    %v1631 = vand.u32 %v1630, 4294901760
    %1632 = vmatpush.msra.mxu0 %v1631
    %v1633 = vand.u32 %v787, 4294901760
    %v1634 = vsub.f32 %v787, %v1633
    %v1635 = vand.u32 %v1634, 4294901760
    %v1636 = vsub.f32 %v1634, %v1635
    %v1637 = vand.u32 %v1636, 4294901760
    %1638 = vmatpush.msra.mxu0 %v1637
    %v1639 = vand.u32 %v1507, 4294901760
    %1640 = vmatmul.f32.gmra.mxu0 %v1639
    %v1641 = vpop.f32.mrf.mxu0
    %v1642 = vadd.f32 %v1555, %v1641
    %v1643 = vand.u32 %v1510, 4294901760
    %1644 = vmatmul.f32.gmra.mxu0 %v1643
    %v1645 = vpop.f32.mrf.mxu0
    %v1646 = vadd.f32 %v1563, %v1645
    %v1647 = vand.u32 %v1513, 4294901760
    %1648 = vmatmul.f32.gmra.mxu0 %v1647
    %v1649 = vpop.f32.mrf.mxu0
    %v1650 = vadd.f32 %v1571, %v1649
    %v1651 = vand.u32 %v1516, 4294901760
    %1652 = vmatmul.f32.gmra.mxu0 %v1651
    %v1653 = vpop.f32.mrf.mxu0
    %v1654 = vadd.f32 %v1579, %v1653
    %v1655 = vand.u32 %v1519, 4294901760
    %1656 = vmatmul.f32.gmra.mxu0 %v1655
    %v1657 = vpop.f32.mrf.mxu0
    %v1658 = vadd.f32 %v1587, %v1657
    %v1659 = vand.u32 %v1522, 4294901760
    %1660 = vmatmul.f32.gmra.mxu0 %v1659
    %v1661 = vpop.f32.mrf.mxu0
    %v1662 = vadd.f32 %v1595, %v1661
    %v1663 = vand.u32 %v1525, 4294901760
    %1664 = vmatmul.f32.gmra.mxu0 %v1663
    %v1665 = vpop.f32.mrf.mxu0
    %v1666 = vadd.f32 %v1603, %v1665
    %v1667 = vand.u32 %v1528, 4294901760
    %1668 = vmatmul.f32.gmra.mxu0 %v1667
    %v1669 = vpop.f32.mrf.mxu0
    %v1670 = vadd.f32 %v1611, %v1669
    %1671 = vdwg.mxu0
    %1672 = vmatpush.msra.mxu0 0.0
    %1673 = vmatpush.msra.mxu0 0.0
    %1674 = vmatpush.msra.mxu0 0.0
    %1675 = vmatpush.msra.mxu0 0.0
    %1676 = vmatpush.msra.mxu0 0.0
    %1677 = vmatpush.msra.mxu0 0.0
    %1678 = vmatpush.msra.mxu0 0.0
    %1679 = vmatpush.msra.mxu0 0.0
    %1680 = vmatpush.msra.mxu0 0.0
    %1681 = vmatpush.msra.mxu0 0.0
    %1682 = vmatpush.msra.mxu0 0.0
    %1683 = vmatpush.msra.mxu0 0.0
    %1684 = vmatpush.msra.mxu0 0.0
    %1685 = vmatpush.msra.mxu0 0.0
    %v1686 = vand.u32 %v791, 4294901760
    %v1687 = vsub.f32 %v791, %v1686
    %1688 = vmatpush.msra.mxu0 %v1687
    %v1689 = vand.u32 %v787, 4294901760
    %v1690 = vsub.f32 %v787, %v1689
    %1691 = vmatpush.msra.mxu0 %v1690
    %v1692 = vand.u32 %v1507, 4294901760
    %v1693 = vsub.f32 %v1507, %v1692
    %1694 = vmatmul.f32.gmra.mxu0 %v1693
    %v1695 = vpop.f32.mrf.mxu0
    %v1696 = vadd.f32 %v1642, %v1695
    %v1697 = vand.u32 %v1510, 4294901760
    %v1698 = vsub.f32 %v1510, %v1697
    %1699 = vmatmul.f32.gmra.mxu0 %v1698
    %v1700 = vpop.f32.mrf.mxu0
    %v1701 = vadd.f32 %v1646, %v1700
    %v1702 = vand.u32 %v1513, 4294901760
    %v1703 = vsub.f32 %v1513, %v1702
    %1704 = vmatmul.f32.gmra.mxu0 %v1703
    %v1705 = vpop.f32.mrf.mxu0
    %v1706 = vadd.f32 %v1650, %v1705
    %v1707 = vand.u32 %v1516, 4294901760
    %v1708 = vsub.f32 %v1516, %v1707
    %1709 = vmatmul.f32.gmra.mxu0 %v1708
    %v1710 = vpop.f32.mrf.mxu0
    %v1711 = vadd.f32 %v1654, %v1710
    %v1712 = vand.u32 %v1519, 4294901760
    %v1713 = vsub.f32 %v1519, %v1712
    %1714 = vmatmul.f32.gmra.mxu0 %v1713
    %v1715 = vpop.f32.mrf.mxu0
    %v1716 = vadd.f32 %v1658, %v1715
    %v1717 = vand.u32 %v1522, 4294901760
    %v1718 = vsub.f32 %v1522, %v1717
    %1719 = vmatmul.f32.gmra.mxu0 %v1718
    %v1720 = vpop.f32.mrf.mxu0
    %v1721 = vadd.f32 %v1662, %v1720
    %v1722 = vand.u32 %v1525, 4294901760
    %v1723 = vsub.f32 %v1525, %v1722
    %1724 = vmatmul.f32.gmra.mxu0 %v1723
    %v1725 = vpop.f32.mrf.mxu0
    %v1726 = vadd.f32 %v1666, %v1725
    %v1727 = vand.u32 %v1528, 4294901760
    %v1728 = vsub.f32 %v1528, %v1727
    %1729 = vmatmul.f32.gmra.mxu0 %v1728
    %v1730 = vpop.f32.mrf.mxu0
    %v1731 = vadd.f32 %v1670, %v1730
    %1732 = vdwg.mxu0
    %1733 = vmatpush.msra.mxu0 0.0
    %1734 = vmatpush.msra.mxu0 0.0
    %1735 = vmatpush.msra.mxu0 0.0
    %1736 = vmatpush.msra.mxu0 0.0
    %1737 = vmatpush.msra.mxu0 0.0
    %1738 = vmatpush.msra.mxu0 0.0
    %1739 = vmatpush.msra.mxu0 0.0
    %1740 = vmatpush.msra.mxu0 0.0
    %1741 = vmatpush.msra.mxu0 0.0
    %1742 = vmatpush.msra.mxu0 0.0
    %1743 = vmatpush.msra.mxu0 0.0
    %1744 = vmatpush.msra.mxu0 0.0
    %1745 = vmatpush.msra.mxu0 0.0
    %1746 = vmatpush.msra.mxu0 0.0
    %v1747 = vand.u32 %v791, 4294901760
    %1748 = vmatpush.msra.mxu0 %v1747
    %v1749 = vand.u32 %v787, 4294901760
    %1750 = vmatpush.msra.mxu0 %v1749
    %v1751 = vand.u32 %v1507, 4294901760
    %v1752 = vsub.f32 %v1507, %v1751
    %v1753 = vand.u32 %v1752, 4294901760
    %1754 = vmatmul.f32.gmra.mxu0 %v1753
    %v1755 = vpop.f32.mrf.mxu0
    %v1756 = vadd.f32 %v1696, %v1755
    %v1757 = vand.u32 %v1510, 4294901760
    %v1758 = vsub.f32 %v1510, %v1757
    %v1759 = vand.u32 %v1758, 4294901760
    %1760 = vmatmul.f32.gmra.mxu0 %v1759
    %v1761 = vpop.f32.mrf.mxu0
    %v1762 = vadd.f32 %v1701, %v1761
    %v1763 = vand.u32 %v1513, 4294901760
    %v1764 = vsub.f32 %v1513, %v1763
    %v1765 = vand.u32 %v1764, 4294901760
    %1766 = vmatmul.f32.gmra.mxu0 %v1765
    %v1767 = vpop.f32.mrf.mxu0
    %v1768 = vadd.f32 %v1706, %v1767
    %v1769 = vand.u32 %v1516, 4294901760
    %v1770 = vsub.f32 %v1516, %v1769
    %v1771 = vand.u32 %v1770, 4294901760
    %1772 = vmatmul.f32.gmra.mxu0 %v1771
    %v1773 = vpop.f32.mrf.mxu0
    %v1774 = vadd.f32 %v1711, %v1773
    %v1775 = vand.u32 %v1519, 4294901760
    %v1776 = vsub.f32 %v1519, %v1775
    %v1777 = vand.u32 %v1776, 4294901760
    %1778 = vmatmul.f32.gmra.mxu0 %v1777
    %v1779 = vpop.f32.mrf.mxu0
    %v1780 = vadd.f32 %v1716, %v1779
    %v1781 = vand.u32 %v1522, 4294901760
    %v1782 = vsub.f32 %v1522, %v1781
    %v1783 = vand.u32 %v1782, 4294901760
    %1784 = vmatmul.f32.gmra.mxu0 %v1783
    %v1785 = vpop.f32.mrf.mxu0
    %v1786 = vadd.f32 %v1721, %v1785
    %v1787 = vand.u32 %v1525, 4294901760
    %v1788 = vsub.f32 %v1525, %v1787
    %v1789 = vand.u32 %v1788, 4294901760
    %1790 = vmatmul.f32.gmra.mxu0 %v1789
    %v1791 = vpop.f32.mrf.mxu0
    %v1792 = vadd.f32 %v1726, %v1791
    %v1793 = vand.u32 %v1528, 4294901760
    %v1794 = vsub.f32 %v1528, %v1793
    %v1795 = vand.u32 %v1794, 4294901760
    %1796 = vmatmul.f32.gmra.mxu0 %v1795
    %v1797 = vpop.f32.mrf.mxu0
    %v1798 = vadd.f32 %v1731, %v1797
    %1799 = vdwg.mxu0
    %1800 = vmatpush.msra.mxu0 0.0
    %1801 = vmatpush.msra.mxu0 0.0
    %1802 = vmatpush.msra.mxu0 0.0
    %1803 = vmatpush.msra.mxu0 0.0
    %1804 = vmatpush.msra.mxu0 0.0
    %1805 = vmatpush.msra.mxu0 0.0
    %1806 = vmatpush.msra.mxu0 0.0
    %1807 = vmatpush.msra.mxu0 0.0
    %1808 = vmatpush.msra.mxu0 0.0
    %1809 = vmatpush.msra.mxu0 0.0
    %1810 = vmatpush.msra.mxu0 0.0
    %1811 = vmatpush.msra.mxu0 0.0
    %1812 = vmatpush.msra.mxu0 0.0
    %1813 = vmatpush.msra.mxu0 0.0
    %v1814 = vand.u32 %v791, 4294901760
    %v1815 = vsub.f32 %v791, %v1814
    %v1816 = vand.u32 %v1815, 4294901760
    %1817 = vmatpush.msra.mxu0 %v1816
    %v1818 = vand.u32 %v787, 4294901760
    %v1819 = vsub.f32 %v787, %v1818
    %v1820 = vand.u32 %v1819, 4294901760
    %1821 = vmatpush.msra.mxu0 %v1820
    %v1822 = vand.u32 %v1507, 4294901760
    %1823 = vmatmul.f32.gmra.mxu0 %v1822
    %v1824 = vpop.f32.mrf.mxu0
    %v1825 = vadd.f32 %v1756, %v1824
    %v1826 = vand.u32 %v1510, 4294901760
    %1827 = vmatmul.f32.gmra.mxu0 %v1826
    %v1828 = vpop.f32.mrf.mxu0
    %v1829 = vadd.f32 %v1762, %v1828
    %v1830 = vand.u32 %v1513, 4294901760
    %1831 = vmatmul.f32.gmra.mxu0 %v1830
    %v1832 = vpop.f32.mrf.mxu0
    %v1833 = vadd.f32 %v1768, %v1832
    %v1834 = vand.u32 %v1516, 4294901760
    %1835 = vmatmul.f32.gmra.mxu0 %v1834
    %v1836 = vpop.f32.mrf.mxu0
    %v1837 = vadd.f32 %v1774, %v1836
    %v1838 = vand.u32 %v1519, 4294901760
    %1839 = vmatmul.f32.gmra.mxu0 %v1838
    %v1840 = vpop.f32.mrf.mxu0
    %v1841 = vadd.f32 %v1780, %v1840
    %v1842 = vand.u32 %v1522, 4294901760
    %1843 = vmatmul.f32.gmra.mxu0 %v1842
    %v1844 = vpop.f32.mrf.mxu0
    %v1845 = vadd.f32 %v1786, %v1844
    %v1846 = vand.u32 %v1525, 4294901760
    %1847 = vmatmul.f32.gmra.mxu0 %v1846
    %v1848 = vpop.f32.mrf.mxu0
    %v1849 = vadd.f32 %v1792, %v1848
    %v1850 = vand.u32 %v1528, 4294901760
    %1851 = vmatmul.f32.gmra.mxu0 %v1850
    %v1852 = vpop.f32.mrf.mxu0
    %v1853 = vadd.f32 %v1798, %v1852
    %1854 = vdwg.mxu0
    %1855 = vmatpush.msra.mxu0 0.0
    %1856 = vmatpush.msra.mxu0 0.0
    %1857 = vmatpush.msra.mxu0 0.0
    %1858 = vmatpush.msra.mxu0 0.0
    %1859 = vmatpush.msra.mxu0 0.0
    %1860 = vmatpush.msra.mxu0 0.0
    %1861 = vmatpush.msra.mxu0 0.0
    %1862 = vmatpush.msra.mxu0 0.0
    %1863 = vmatpush.msra.mxu0 0.0
    %1864 = vmatpush.msra.mxu0 0.0
    %1865 = vmatpush.msra.mxu0 0.0
    %1866 = vmatpush.msra.mxu0 0.0
    %1867 = vmatpush.msra.mxu0 0.0
    %1868 = vmatpush.msra.mxu0 0.0
    %v1869 = vand.u32 %v791, 4294901760
    %1870 = vmatpush.msra.mxu0 %v1869
    %v1871 = vand.u32 %v787, 4294901760
    %1872 = vmatpush.msra.mxu0 %v1871
    %v1873 = vand.u32 %v1507, 4294901760
    %1874 = vmatmul.f32.gmra.mxu0 %v1873
    %v1875 = vpop.f32.mrf.mxu0
    %v1876 = vadd.f32 %v1825, %v1875
    %v1877 = vand.u32 %v1510, 4294901760
    %1878 = vmatmul.f32.gmra.mxu0 %v1877
    %v1879 = vpop.f32.mrf.mxu0
    %v1880 = vadd.f32 %v1829, %v1879
    %v1881 = vand.u32 %v1513, 4294901760
    %1882 = vmatmul.f32.gmra.mxu0 %v1881
    %v1883 = vpop.f32.mrf.mxu0
    %v1884 = vadd.f32 %v1833, %v1883
    %v1885 = vand.u32 %v1516, 4294901760
    %1886 = vmatmul.f32.gmra.mxu0 %v1885
    %v1887 = vpop.f32.mrf.mxu0
    %v1888 = vadd.f32 %v1837, %v1887
    %v1889 = vand.u32 %v1519, 4294901760
    %1890 = vmatmul.f32.gmra.mxu0 %v1889
    %v1891 = vpop.f32.mrf.mxu0
    %v1892 = vadd.f32 %v1841, %v1891
    %v1893 = vand.u32 %v1522, 4294901760
    %1894 = vmatmul.f32.gmra.mxu0 %v1893
    %v1895 = vpop.f32.mrf.mxu0
    %v1896 = vadd.f32 %v1845, %v1895
    %v1897 = vand.u32 %v1525, 4294901760
    %1898 = vmatmul.f32.gmra.mxu0 %v1897
    %v1899 = vpop.f32.mrf.mxu0
    %v1900 = vadd.f32 %v1849, %v1899
    %v1901 = vand.u32 %v1528, 4294901760
    %1902 = vmatmul.f32.gmra.mxu0 %v1901
    %v1903 = vpop.f32.mrf.mxu0
    %v1904 = vadd.f32 %v1853, %v1903
    %1905 = vdwg.mxu0
    %v1906 = vsel %vm867, %v1876, 0.0
    %v1907 = vsel %vm868, %v1880, 0.0
    %v1908 = vsel %vm869, %v1884, 0.0
    %v1909 = vsel %vm870, %v1888, 0.0
    %v1910 = vsel %vm871, %v1892, 0.0
    %v1911 = vsel %vm872, %v1896, 0.0
    %v1912 = vsel %vm873, %v1900, 0.0
    %v1913 = vsel %vm874, %v1904, 0.0
    %v1914 = vadd.f32 %v1906, %v1908
    %v1915 = vadd.f32 %v1907, %v1909
    %v1916 = vadd.f32 %v1914, %v1910
    %v1917 = vadd.f32 %v1915, %v1911
    %v1918 = vadd.f32 %v1916, %v1912
    %v1919 = vadd.f32 %v1917, %v1913
    %v1920 = vperm.slane %v116, 3
    %v1922 = vsel %vm124, %v1918, 0
    %v1925 = vsel %vm124, %v1919, 0
    %1927 = vmatpush.msra.mxu0 0.0
    %1928 = vmatpush.msra.mxu0 0.0
    %1929 = vmatpush.msra.mxu0 0.0
    %1930 = vmatpush.msra.mxu0 0.0
    %1931 = vmatpush.msra.mxu0 0.0
    %1932 = vmatpush.msra.mxu0 0.0
    %1933 = vmatpush.msra.mxu0 0.0
    %1934 = vmatpush.msra.mxu0 0.0
    %1935 = vmatpush.msra.mxu0 0.0
    %1936 = vmatpush.msra.mxu0 0.0
    %1937 = vmatpush.msra.mxu0 0.0
    %1938 = vmatpush.msra.mxu0 0.0
    %v1939 = vand.u32 %v115, 4294901760
    %1940 = vmatpush.msra.mxu0 %v1939
    %v1941 = vand.u32 %v114, 4294901760
    %1942 = vmatpush.msra.mxu0 %v1941
    %v1943 = vand.u32 %v113, 4294901760
    %1944 = vmatpush.msra.mxu0 %v1943
    %v1945 = vand.u32 %v112, 4294901760
    %1946 = vmatpush.msra.mxu0 %v1945
    %v1947 = vand.u32 %v1922, 4294901760
    %v1948 = vsub.f32 %v1922, %v1947
    %v1949 = vand.u32 %v1948, 4294901760
    %v1950 = vsub.f32 %v1948, %v1949
    %v1951 = vand.u32 %v1950, 4294901760
    %1952 = vmatmul.f32.gmra.mxu0 %v1951
    %v1953 = vpop.f32.mrf.mxu0
    %v1954 = vadd.f32 %v1920, %v1953
    %v1955 = vand.u32 %v1925, 4294901760
    %v1956 = vsub.f32 %v1925, %v1955
    %v1957 = vand.u32 %v1956, 4294901760
    %v1958 = vsub.f32 %v1956, %v1957
    %v1959 = vand.u32 %v1958, 4294901760
    %1960 = vmatmul.f32.gmra.mxu0 %v1959
    %v1961 = vpop.f32.mrf.mxu0
    %v1962 = vadd.f32 %v1920, %v1961
    %1963 = vdwg.mxu0
    %1964 = vmatpush.msra.mxu0 0.0
    %1965 = vmatpush.msra.mxu0 0.0
    %1966 = vmatpush.msra.mxu0 0.0
    %1967 = vmatpush.msra.mxu0 0.0
    %1968 = vmatpush.msra.mxu0 0.0
    %1969 = vmatpush.msra.mxu0 0.0
    %1970 = vmatpush.msra.mxu0 0.0
    %1971 = vmatpush.msra.mxu0 0.0
    %1972 = vmatpush.msra.mxu0 0.0
    %1973 = vmatpush.msra.mxu0 0.0
    %1974 = vmatpush.msra.mxu0 0.0
    %1975 = vmatpush.msra.mxu0 0.0
    %v1976 = vand.u32 %v115, 4294901760
    %v1977 = vsub.f32 %v115, %v1976
    %v1978 = vand.u32 %v1977, 4294901760
    %v1979 = vsub.f32 %v1977, %v1978
    %v1980 = vand.u32 %v1979, 4294901760
    %1981 = vmatpush.msra.mxu0 %v1980
    %v1982 = vand.u32 %v114, 4294901760
    %v1983 = vsub.f32 %v114, %v1982
    %v1984 = vand.u32 %v1983, 4294901760
    %v1985 = vsub.f32 %v1983, %v1984
    %v1986 = vand.u32 %v1985, 4294901760
    %1987 = vmatpush.msra.mxu0 %v1986
    %v1988 = vand.u32 %v113, 4294901760
    %v1989 = vsub.f32 %v113, %v1988
    %v1990 = vand.u32 %v1989, 4294901760
    %v1991 = vsub.f32 %v1989, %v1990
    %v1992 = vand.u32 %v1991, 4294901760
    %1993 = vmatpush.msra.mxu0 %v1992
    %v1994 = vand.u32 %v112, 4294901760
    %v1995 = vsub.f32 %v112, %v1994
    %v1996 = vand.u32 %v1995, 4294901760
    %v1997 = vsub.f32 %v1995, %v1996
    %v1998 = vand.u32 %v1997, 4294901760
    %1999 = vmatpush.msra.mxu0 %v1998
    %v2000 = vand.u32 %v1922, 4294901760
    %2001 = vmatmul.f32.gmra.mxu0 %v2000
    %v2002 = vpop.f32.mrf.mxu0
    %v2003 = vadd.f32 %v1954, %v2002
    %v2004 = vand.u32 %v1925, 4294901760
    %2005 = vmatmul.f32.gmra.mxu0 %v2004
    %v2006 = vpop.f32.mrf.mxu0
    %v2007 = vadd.f32 %v1962, %v2006
    %2008 = vdwg.mxu0
    %2009 = vmatpush.msra.mxu0 0.0
    %2010 = vmatpush.msra.mxu0 0.0
    %2011 = vmatpush.msra.mxu0 0.0
    %2012 = vmatpush.msra.mxu0 0.0
    %2013 = vmatpush.msra.mxu0 0.0
    %2014 = vmatpush.msra.mxu0 0.0
    %2015 = vmatpush.msra.mxu0 0.0
    %2016 = vmatpush.msra.mxu0 0.0
    %2017 = vmatpush.msra.mxu0 0.0
    %2018 = vmatpush.msra.mxu0 0.0
    %2019 = vmatpush.msra.mxu0 0.0
    %2020 = vmatpush.msra.mxu0 0.0
    %v2021 = vand.u32 %v115, 4294901760
    %v2022 = vsub.f32 %v115, %v2021
    %2023 = vmatpush.msra.mxu0 %v2022
    %v2024 = vand.u32 %v114, 4294901760
    %v2025 = vsub.f32 %v114, %v2024
    %2026 = vmatpush.msra.mxu0 %v2025
    %v2027 = vand.u32 %v113, 4294901760
    %v2028 = vsub.f32 %v113, %v2027
    %2029 = vmatpush.msra.mxu0 %v2028
    %v2030 = vand.u32 %v112, 4294901760
    %v2031 = vsub.f32 %v112, %v2030
    %2032 = vmatpush.msra.mxu0 %v2031
    %v2033 = vand.u32 %v1922, 4294901760
    %v2034 = vsub.f32 %v1922, %v2033
    %2035 = vmatmul.f32.gmra.mxu0 %v2034
    %v2036 = vpop.f32.mrf.mxu0
    %v2037 = vadd.f32 %v2003, %v2036
    %v2038 = vand.u32 %v1925, 4294901760
    %v2039 = vsub.f32 %v1925, %v2038
    %2040 = vmatmul.f32.gmra.mxu0 %v2039
    %v2041 = vpop.f32.mrf.mxu0
    %v2042 = vadd.f32 %v2007, %v2041
    %2043 = vdwg.mxu0
    %2044 = vmatpush.msra.mxu0 0.0
    %2045 = vmatpush.msra.mxu0 0.0
    %2046 = vmatpush.msra.mxu0 0.0
    %2047 = vmatpush.msra.mxu0 0.0
    %2048 = vmatpush.msra.mxu0 0.0
    %2049 = vmatpush.msra.mxu0 0.0
    %2050 = vmatpush.msra.mxu0 0.0
    %2051 = vmatpush.msra.mxu0 0.0
    %2052 = vmatpush.msra.mxu0 0.0
    %2053 = vmatpush.msra.mxu0 0.0
    %2054 = vmatpush.msra.mxu0 0.0
    %2055 = vmatpush.msra.mxu0 0.0
    %v2056 = vand.u32 %v115, 4294901760
    %2057 = vmatpush.msra.mxu0 %v2056
    %v2058 = vand.u32 %v114, 4294901760
    %2059 = vmatpush.msra.mxu0 %v2058
    %v2060 = vand.u32 %v113, 4294901760
    %2061 = vmatpush.msra.mxu0 %v2060
    %v2062 = vand.u32 %v112, 4294901760
    %2063 = vmatpush.msra.mxu0 %v2062
    %v2064 = vand.u32 %v1922, 4294901760
    %v2065 = vsub.f32 %v1922, %v2064
    %v2066 = vand.u32 %v2065, 4294901760
    %2067 = vmatmul.f32.gmra.mxu0 %v2066
    %v2068 = vpop.f32.mrf.mxu0
    %v2069 = vadd.f32 %v2037, %v2068
    %v2070 = vand.u32 %v1925, 4294901760
    %v2071 = vsub.f32 %v1925, %v2070
    %v2072 = vand.u32 %v2071, 4294901760
    %2073 = vmatmul.f32.gmra.mxu0 %v2072
    %v2074 = vpop.f32.mrf.mxu0
    %v2075 = vadd.f32 %v2042, %v2074
    %2076 = vdwg.mxu0
    %2077 = vmatpush.msra.mxu0 0.0
    %2078 = vmatpush.msra.mxu0 0.0
    %2079 = vmatpush.msra.mxu0 0.0
    %2080 = vmatpush.msra.mxu0 0.0
    %2081 = vmatpush.msra.mxu0 0.0
    %2082 = vmatpush.msra.mxu0 0.0
    %2083 = vmatpush.msra.mxu0 0.0
    %2084 = vmatpush.msra.mxu0 0.0
    %2085 = vmatpush.msra.mxu0 0.0
    %2086 = vmatpush.msra.mxu0 0.0
    %2087 = vmatpush.msra.mxu0 0.0
    %2088 = vmatpush.msra.mxu0 0.0
    %v2089 = vand.u32 %v115, 4294901760
    %v2090 = vsub.f32 %v115, %v2089
    %v2091 = vand.u32 %v2090, 4294901760
    %2092 = vmatpush.msra.mxu0 %v2091
    %v2093 = vand.u32 %v114, 4294901760
    %v2094 = vsub.f32 %v114, %v2093
    %v2095 = vand.u32 %v2094, 4294901760
    %2096 = vmatpush.msra.mxu0 %v2095
    %v2097 = vand.u32 %v113, 4294901760
    %v2098 = vsub.f32 %v113, %v2097
    %v2099 = vand.u32 %v2098, 4294901760
    %2100 = vmatpush.msra.mxu0 %v2099
    %v2101 = vand.u32 %v112, 4294901760
    %v2102 = vsub.f32 %v112, %v2101
    %v2103 = vand.u32 %v2102, 4294901760
    %2104 = vmatpush.msra.mxu0 %v2103
    %v2105 = vand.u32 %v1922, 4294901760
    %2106 = vmatmul.f32.gmra.mxu0 %v2105
    %v2107 = vpop.f32.mrf.mxu0
    %v2108 = vadd.f32 %v2069, %v2107
    %v2109 = vand.u32 %v1925, 4294901760
    %2110 = vmatmul.f32.gmra.mxu0 %v2109
    %v2111 = vpop.f32.mrf.mxu0
    %v2112 = vadd.f32 %v2075, %v2111
    %2113 = vdwg.mxu0
    %2114 = vmatpush.msra.mxu0 0.0
    %2115 = vmatpush.msra.mxu0 0.0
    %2116 = vmatpush.msra.mxu0 0.0
    %2117 = vmatpush.msra.mxu0 0.0
    %2118 = vmatpush.msra.mxu0 0.0
    %2119 = vmatpush.msra.mxu0 0.0
    %2120 = vmatpush.msra.mxu0 0.0
    %2121 = vmatpush.msra.mxu0 0.0
    %2122 = vmatpush.msra.mxu0 0.0
    %2123 = vmatpush.msra.mxu0 0.0
    %2124 = vmatpush.msra.mxu0 0.0
    %2125 = vmatpush.msra.mxu0 0.0
    %v2126 = vand.u32 %v115, 4294901760
    %2127 = vmatpush.msra.mxu0 %v2126
    %v2128 = vand.u32 %v114, 4294901760
    %2129 = vmatpush.msra.mxu0 %v2128
    %v2130 = vand.u32 %v113, 4294901760
    %2131 = vmatpush.msra.mxu0 %v2130
    %v2132 = vand.u32 %v112, 4294901760
    %2133 = vmatpush.msra.mxu0 %v2132
    %v2134 = vand.u32 %v1922, 4294901760
    %2135 = vmatmul.f32.gmra.mxu0 %v2134
    %v2136 = vpop.f32.mrf.mxu0
    %v2137 = vadd.f32 %v2108, %v2136
    %v2138 = vand.u32 %v1925, 4294901760
    %2139 = vmatmul.f32.gmra.mxu0 %v2138
    %v2140 = vpop.f32.mrf.mxu0
    %v2141 = vadd.f32 %v2112, %v2140
    %2142 = vdwg.mxu0
    %v2143 = vsel %vm124, %v2137, 0.0
    %2144 = vadd.xlane.f32.xlu0 %v2143
    %v2145 = vpop.xlane.xlu0 %2144
    %v2146 = vsel %vm124, %v2141, 0.0
    %2147 = vadd.xlane.f32.xlu0 %v2146
    %v2148 = vpop.xlane.xlu0 %2147
    %v2149 = vrcp.pop 32.0
    %v2150 = vmul.f32 32.0, %v2149
    %v2151 = vsub.f32 1.0, %v2150
    %v2152 = vmul.f32 %v2149, %v2151
    %v2153 = vadd.f32 %v2149, %v2152
    %vm2154 = vweird.f32 %v2149
    %v2155 = vsel %vm2154, %v2149, %v2153
    %v2156 = vmul.f32 %v2145, %v2155
    %v2157 = vmul.f32 %v2148, %v2155
    %v2158 = vsub.f32 %v2137, %v2156
    %v2159 = vsub.f32 %v2141, %v2157
    %v2160 = vmul.f32 %v2158, %v2158
    %v2161 = vmul.f32 %v2159, %v2159
    %v2162 = vsel %vm124, %v2160, 0.0
    %2163 = vadd.xlane.f32.xlu0 %v2162
    %v2164 = vpop.xlane.xlu0 %2163
    %v2165 = vsel %vm124, %v2161, 0.0
    %2166 = vadd.xlane.f32.xlu0 %v2165
    %v2167 = vpop.xlane.xlu0 %2166
    %v2168 = vmul.f32 %v2164, %v2155
    %v2169 = vmul.f32 %v2167, %v2155
    %v2170 = vadd.f32 %v2168, 1e-05
    %v2171 = vadd.f32 %v2169, 1e-05
    %v2172 = vrsqrt.pop %v2170
    %v2173 = vmul.f32 %v2172, %v2170
    %v2174 = vmul.f32 %v2173, %v2172
    %v2175 = vmul.f32 0.5, %v2174
    %v2176 = vsub.f32 1.5, %v2175
    %v2177 = vmul.f32 %v2172, %v2176
    %vm2178 = vweird.f32 %v2170
    %vm2179 = vweird.f32 %v2172
    %vm2180 = vmor %vm2178, %vm2179
    %v2181 = vsel %vm2180, %v2172, %v2177
    %v2182 = vrsqrt.pop %v2171
    %v2183 = vmul.f32 %v2182, %v2171
    %v2184 = vmul.f32 %v2183, %v2182
    %v2185 = vmul.f32 0.5, %v2184
    %v2186 = vsub.f32 1.5, %v2185
    %v2187 = vmul.f32 %v2182, %v2186
    %vm2188 = vweird.f32 %v2171
    %vm2189 = vweird.f32 %v2182
    %vm2190 = vmor %vm2188, %vm2189
    %v2191 = vsel %vm2190, %v2182, %v2187
    %v2192 = vmul.f32 %v2158, %v2181
    %v2193 = vmul.f32 %v2159, %v2191
    %v2194 = vperm.slane %v116, 4
    %v2195 = vmul.f32 %v2192, %v2194
    %v2196 = vmul.f32 %v2193, %v2194
    %v2197 = vperm.slane %v116, 5
    %v2198 = vadd.f32 %v2195, %v2197
    %v2199 = vadd.f32 %v2196, %v2197
    %2200 = vst.msk [vmem:[#allocation11] sm:$0xff] %vm124, %v2198
    %2201 = vst.msk [vmem:[#allocation11 + $0x8] sm:$0xff] %vm124, %v2199
    // Predicated region
    $region46: #{fwd.1} parent=1 // pred_check
      _
    $region47: #{fwd.1} parent=1 // pred_check_branch
      %2203 = sbr.rel (0) target = $region49
    $region48: #{fwd.1} parent=1 // pred_region
      %2205 = vsyncadd [#allocation4], 0
      %s2206 = sshll.u32 [#allocation11], 4
      %s2207 = int_to_ptr.vmem [resolvable:$true] %s2206
      %s2208 = sshll.u32 %s6, 4
      %s2209 = int_to_ptr.hbm [resolvable:$true] %s2208
      %2214 = dma.vmem_to_hbm [thread:$0]  %s2207, 256, %s2209, [#allocation4], 128, 128, 8
    $region49: #{fwd.1} parent=1 // pred_fallthru
      _
    // Predicated region
    $region50: #{fwd.1} parent=1 // pred_check
      _
    $region51: #{fwd.1} parent=1 // pred_check_branch
      %2216 = sbr.rel (0) target = $region53
    $region52: #{fwd.1} parent=1 // pred_region
      %2218 = dma.done [#allocation4], 256
    $region53: #{fwd.1} parent=1 // pred_fallthru
      _
    %2219 = vsyncpa [#allocation3], 1
    %2220 = vsyncpa [#allocation6], 1
    %2221 = vsyncpa [#allocation9], 1
    %2222 = vsyncpa [#allocation4], 1

</llo_original>
